<compile_context>
chip_gen: v7x
topology: tpu7x:2x2x1
jax: 0.10.0
libtpu: 0.0.40
codegen_flags: <defaults>
</compile_context>

<pallas_src>
import functools

import jax
import jax.numpy as jnp
from jax import lax
from jax.experimental import pallas as pl
from jax.experimental.pallas import tpu as pltpu

EMBEDDING_SIZE = 10
HIDDEN_SIZE = 8
INPUT_SIZE = 4          # vocab size of the embedding
NUM_CLASS = 4
NUM_LAYERS = 2

# ---- packed parameter slab layout (single f32 (64,128) array -> one DMA) ----
SLAB_ROWS, SLAB_COLS = 64, 128
EMB_R = 0      # rows 0:4   cols 0:10  embedding table (V, E)
WIH0_R = 8     # rows 8:18  cols 0:8   W_ih layer0, pre-transposed (E, H)
WHH0_R = 24    # rows 24:32 cols 0:8   W_hh layer0 (H, H)
WIH1_R = 32    # rows 32:40 cols 0:8   W_ih layer1 (H, H)
WHH1_R = 40    # rows 40:48 cols 0:8   W_hh layer1 (H, H)
WFC_R = 48     # rows 48:56 cols 0:4   fc weight, pre-transposed (H, C)
B0_R = 56      # row 56     cols 0:8   b_ih0 + b_hh0
B1_R = 57      # row 57     cols 0:8   b_ih1 + b_hh1
BFC_R = 58     # row 58     cols 0:4   fc bias


def rnn_fused_kernel(tok_ref, p_ref, out_ref, h1buf_ref, *, batch, seq):
    """Single-program fused forward.

    tok_ref:   (seq*batch, 1) int32, t-major (row t*batch + b = token x[b, t])
    p_ref:     (64, 128) f32 packed parameter slab (see layout above)
    out_ref:   (batch*seq, NUM_CLASS) f32, b-major (row b*seq + t)
    h1buf_ref: VMEM scratch (batch*seq, HIDDEN_SIZE), b-major layer-1 outputs
    """
    V, E, H, C = INPUT_SIZE, EMBEDDING_SIZE, HIDDEN_SIZE, NUM_CLASS
    n_tok = seq * batch

    # --- static slices of the packed slab (one DMA already brought it all) ---
    table = p_ref[EMB_R:EMB_R + V, 0:E]
    wih0 = p_ref[WIH0_R:WIH0_R + E, 0:H]
    whh0 = p_ref[WHH0_R:WHH0_R + H, 0:H]
    wih1 = p_ref[WIH1_R:WIH1_R + H, 0:H]
    whh1 = p_ref[WHH1_R:WHH1_R + H, 0:H]
    wfc = p_ref[WFC_R:WFC_R + H, 0:C]
    b0 = p_ref[B0_R:B0_R + 1, 0:H]
    b1 = p_ref[B1_R:B1_R + 1, 0:H]
    bfc = p_ref[BFC_R:BFC_R + 1, 0:C]

    # --- embedding lookup, hoisted out of the time loop ----------------------
    tok = tok_ref[...]                                              # (SB, 1) i32
    onehot = (lax.broadcasted_iota(jnp.int32, (n_tok, V), 1)
              == tok).astype(jnp.float32)                           # (SB, V)
    x_all = jnp.dot(onehot, table,
                    preferred_element_type=jnp.float32)             # (SB, E)
    # layer-0 input projection for ALL timesteps in one matmul (off the chain)
    xp0_all = jnp.dot(x_all, wih0,
                      preferred_element_type=jnp.float32) + b0      # (SB, H)

    # --- serial recurrence (static unroll; only recurrent matmuls remain) ----
    h0 = jnp.zeros((batch, H), jnp.float32)
    h1 = jnp.zeros((batch, H), jnp.float32)
    for t in range(seq):
        xp0_t = xp0_all[t * batch:(t + 1) * batch, :]               # (B, H)
        h0 = jnp.tanh(xp0_t
                      + jnp.dot(h0, whh0, preferred_element_type=jnp.float32))
        h1 = jnp.tanh(jnp.dot(h0, wih1, preferred_element_type=jnp.float32)
                      + jnp.dot(h1, whh1, preferred_element_type=jnp.float32)
                      + b1)
        # stash layer-1 output directly in b-major row order (b*seq + t)
        for b in range(batch):
            r = b * seq + t
            h1buf_ref[r:r + 1, :] = h1[b:b + 1, :]

    # --- final FC on all timesteps at once + single lane-dense-ish store -----
    h_all = h1buf_ref[...]                                          # (B*S, H)
    out_ref[...] = (jnp.dot(h_all, wfc, preferred_element_type=jnp.float32)
                    + bfc)                                          # (B*S, C)


@jax.jit
def model_forward(x, slab):
    """x: (B, S) int32 token indices in [0, INPUT_SIZE). Returns (B*S, C)."""
    B, S = x.shape
    # t-major token column so per-timestep slices of hoisted projections are
    # contiguous inside the kernel (tiny glue, fused under jit).
    tok = x.T.reshape(S * B, 1).astype(jnp.int32)
    vmem = pl.BlockSpec(memory_space=pltpu.MemorySpace.VMEM)
    kernel = functools.partial(rnn_fused_kernel, batch=B, seq=S)
    return pl.pallas_call(
        kernel,
        out_shape=jax.ShapeDtypeStruct((B * S, NUM_CLASS), jnp.float32),
        in_specs=[vmem, vmem],
        out_specs=vmem,
        scratch_shapes=[pltpu.VMEM((B * S, HIDDEN_SIZE), jnp.float32)],
    )(tok, slab)
    # TODO(synk): for real batch sizes, add a grid over B with
    # dimension_semantics=("parallel",) to use both TensorCores on v7x.


def init_params(key):
    ks = jax.random.split(key, 12)
    k_rnn = 1.0 / jnp.sqrt(HIDDEN_SIZE)
    k_fc = 1.0 / jnp.sqrt(HIDDEN_SIZE)

    def unif(k, shape, bound):
        return jax.random.uniform(k, shape, jnp.float32, -bound, bound)

    # Embedding ~ N(0, 1) like torch.nn.Embedding default
    emb = jax.random.normal(ks[0], (INPUT_SIZE, EMBEDDING_SIZE), jnp.float32)
    # RNN layer 0 (weights stored pre-transposed: x @ W)
    wih0 = unif(ks[1], (EMBEDDING_SIZE, HIDDEN_SIZE), k_rnn)
    whh0 = unif(ks[2], (HIDDEN_SIZE, HIDDEN_SIZE), k_rnn)
    b0 = (unif(ks[3], (1, HIDDEN_SIZE), k_rnn)
          + unif(ks[4], (1, HIDDEN_SIZE), k_rnn))          # b_ih0 + b_hh0
    # RNN layer 1
    wih1 = unif(ks[5], (HIDDEN_SIZE, HIDDEN_SIZE), k_rnn)
    whh1 = unif(ks[6], (HIDDEN_SIZE, HIDDEN_SIZE), k_rnn)
    b1 = (unif(ks[7], (1, HIDDEN_SIZE), k_rnn)
          + unif(ks[8], (1, HIDDEN_SIZE), k_rnn))          # b_ih1 + b_hh1
    # Linear(hidden -> num_class)
    wfc = unif(ks[9], (HIDDEN_SIZE, NUM_CLASS), k_fc)
    bfc = unif(ks[10], (1, NUM_CLASS), k_fc)

    # Pack everything into one (64, 128) f32 slab -> single parameter DMA.
    slab = jnp.zeros((SLAB_ROWS, SLAB_COLS), jnp.float32)
    slab = slab.at[EMB_R:EMB_R + INPUT_SIZE, :EMBEDDING_SIZE].set(emb)
    slab = slab.at[WIH0_R:WIH0_R + EMBEDDING_SIZE, :HIDDEN_SIZE].set(wih0)
    slab = slab.at[WHH0_R:WHH0_R + HIDDEN_SIZE, :HIDDEN_SIZE].set(whh0)
    slab = slab.at[WIH1_R:WIH1_R + HIDDEN_SIZE, :HIDDEN_SIZE].set(wih1)
    slab = slab.at[WHH1_R:WHH1_R + HIDDEN_SIZE, :HIDDEN_SIZE].set(whh1)
    slab = slab.at[WFC_R:WFC_R + HIDDEN_SIZE, :NUM_CLASS].set(wfc)
    slab = slab.at[B0_R, :HIDDEN_SIZE].set(b0[0])
    slab = slab.at[B1_R, :HIDDEN_SIZE].set(b1[0])
    slab = slab.at[BFC_R, :NUM_CLASS].set(bfc[0])

    return dict(slab=slab, emb=emb, wih0=wih0, whh0=whh0, b0=b0,
                wih1=wih1, whh1=whh1, b1=b1, wfc=wfc, bfc=bfc)


def ref_forward(x, params):
    """Pure-JAX reference of the PyTorch forward (for correctness check)."""
    B, S = x.shape
    emb = params["emb"][x]                                 # (B, S, E)
    h0 = jnp.zeros((B, HIDDEN_SIZE), jnp.float32)
    h1 = jnp.zeros((B, HIDDEN_SIZE), jnp.float32)
    outs = []
    for t in range(S):
        h0 = jnp.tanh(emb[:, t] @ params["wih0"] + h0 @ params["whh0"]
                      + params["b0"][0])
        h1 = jnp.tanh(h0 @ params["wih1"] + h1 @ params["whh1"]
                      + params["b1"][0])
        outs.append(h1 @ params["wfc"] + params["bfc"][0])
    return jnp.stack(outs, axis=1).reshape(-1, NUM_CLASS)


if __name__ == "__main__":
    key = jax.random.PRNGKey(0)
    k_x, k_p = jax.random.split(key)
    B, S = 2, 8
    x = jax.random.randint(k_x, (B, S), 0, INPUT_SIZE, dtype=jnp.int32)
    params = init_params(k_p)

    out = model_forward(x, params["slab"])
    out = jax.block_until_ready(out)

    ref = ref_forward(x, params)
    assert out.shape == (B * S, NUM_CLASS), out.shape
    assert jnp.allclose(out, ref, atol=1e-5, rtol=1e-5), "mismatch vs reference"
    print("KERNEL_OK")
</pallas_src>

<mosaic_0001>
module attributes {stable_mosaic.version = 11 : i64} {
  func.func @rnn_fused_kernel(%arg0: memref<16x1xi32, #tpu.memory_space<vmem>>, %arg1: memref<64x128xf32, #tpu.memory_space<vmem>>, %arg2: memref<16x4xf32, #tpu.memory_space<vmem>>, %arg3: memref<16x8xf32, #tpu.memory_space<vmem>>) attributes {dimension_semantics = [], scalar_prefetch = 0 : i64, scratch_operands = 1 : i64, tpu.core_type = #tpu.core_type<tc>} {
    %c0 = arith.constant 0 : index
    %c0_0 = arith.constant 0 : index
    %0 = vector.load %arg1[%c0, %c0_0] : memref<64x128xf32, #tpu.memory_space<vmem>>, vector<4x10xf32>
    %c8 = arith.constant 8 : index
    %c0_1 = arith.constant 0 : index
    %1 = vector.load %arg1[%c8, %c0_1] : memref<64x128xf32, #tpu.memory_space<vmem>>, vector<10x8xf32>
    %c24 = arith.constant 24 : index
    %c0_2 = arith.constant 0 : index
    %2 = vector.load %arg1[%c24, %c0_2] : memref<64x128xf32, #tpu.memory_space<vmem>>, vector<8x8xf32>
    %c32 = arith.constant 32 : index
    %c0_3 = arith.constant 0 : index
    %3 = vector.load %arg1[%c32, %c0_3] : memref<64x128xf32, #tpu.memory_space<vmem>>, vector<8x8xf32>
    %c40 = arith.constant 40 : index
    %c0_4 = arith.constant 0 : index
    %4 = vector.load %arg1[%c40, %c0_4] : memref<64x128xf32, #tpu.memory_space<vmem>>, vector<8x8xf32>
    %c48 = arith.constant 48 : index
    %c0_5 = arith.constant 0 : index
    %5 = vector.load %arg1[%c48, %c0_5] : memref<64x128xf32, #tpu.memory_space<vmem>>, vector<8x4xf32>
    %c56 = arith.constant 56 : index
    %c0_6 = arith.constant 0 : index
    %6 = vector.load %arg1[%c56, %c0_6] : memref<64x128xf32, #tpu.memory_space<vmem>>, vector<1x8xf32>
    %c57 = arith.constant 57 : index
    %c0_7 = arith.constant 0 : index
    %7 = vector.load %arg1[%c57, %c0_7] : memref<64x128xf32, #tpu.memory_space<vmem>>, vector<1x8xf32>
    %c58 = arith.constant 58 : index
    %c0_8 = arith.constant 0 : index
    %8 = vector.load %arg1[%c58, %c0_8] : memref<64x128xf32, #tpu.memory_space<vmem>>, vector<1x4xf32>
    %c0_9 = arith.constant 0 : index
    %c0_10 = arith.constant 0 : index
    %9 = vector.load %arg0[%c0_9, %c0_10] : memref<16x1xi32, #tpu.memory_space<vmem>>, vector<16x1xi32>
    %10 = tpu.iota {dimensions = array<i32: 1>} : vector<16x4xi32>
    %11 = vector.broadcast %9 : vector<16x1xi32> to vector<16x4xi32>
    %12 = arith.cmpi eq, %10, %11 : vector<16x4xi32>
    %13 = arith.extui %12 : vector<16x4xi1> to vector<16x4xi32>
    %14 = arith.sitofp %13 : vector<16x4xi32> to vector<16x4xf32>
    %cst = arith.constant dense<0.000000e+00> : vector<16x10xf32>
    %15 = tpu.matmul %14, %0, %cst {dimension_numbers = #tpu.dot_dimension_numbers<[1], [0], [0], [1], [0, 0, 1, 1], [], []>} : vector<16x4xf32>, vector<4x10xf32>, vector<16x10xf32> -> vector<16x10xf32>
    %cst_11 = arith.constant dense<0.000000e+00> : vector<16x8xf32>
    %16 = tpu.matmul %15, %1, %cst_11 {dimension_numbers = #tpu.dot_dimension_numbers<[1], [0], [0], [1], [0, 0, 1, 1], [], []>} : vector<16x10xf32>, vector<10x8xf32>, vector<16x8xf32> -> vector<16x8xf32>
    %17 = vector.broadcast %6 : vector<1x8xf32> to vector<16x8xf32>
    %18 = arith.addf %16, %17 : vector<16x8xf32>
    %cst_12 = arith.constant 0.000000e+00 : f32
    %19 = vector.broadcast %cst_12 : f32 to vector<2x8xf32>
    %cst_13 = arith.constant 0.000000e+00 : f32
    %20 = vector.broadcast %cst_13 : f32 to vector<2x8xf32>
    %21 = vector.extract_strided_slice %18 {offsets = [0, 0], sizes = [2, 8], strides = [1, 1]} : vector<16x8xf32> to vector<2x8xf32>
    %cst_14 = arith.constant dense<0.000000e+00> : vector<2x8xf32>
    %22 = tpu.matmul %19, %2, %cst_14 {dimension_numbers = #tpu.dot_dimension_numbers<[1], [0], [0], [1], [0, 0, 1, 1], [], []>} : vector<2x8xf32>, vector<8x8xf32>, vector<2x8xf32> -> vector<2x8xf32>
    %23 = arith.addf %21, %22 : vector<2x8xf32>
    %24 = math.tanh %23 : vector<2x8xf32>
    %cst_15 = arith.constant dense<0.000000e+00> : vector<2x8xf32>
    %25 = tpu.matmul %24, %3, %cst_15 {dimension_numbers = #tpu.dot_dimension_numbers<[1], [0], [0], [1], [0, 0, 1, 1], [], []>} : vector<2x8xf32>, vector<8x8xf32>, vector<2x8xf32> -> vector<2x8xf32>
    %cst_16 = arith.constant dense<0.000000e+00> : vector<2x8xf32>
    %26 = tpu.matmul %20, %4, %cst_16 {dimension_numbers = #tpu.dot_dimension_numbers<[1], [0], [0], [1], [0, 0, 1, 1], [], []>} : vector<2x8xf32>, vector<8x8xf32>, vector<2x8xf32> -> vector<2x8xf32>
    %27 = arith.addf %25, %26 : vector<2x8xf32>
    %28 = vector.broadcast %7 : vector<1x8xf32> to vector<2x8xf32>
    %29 = arith.addf %27, %28 : vector<2x8xf32>
    %30 = math.tanh %29 : vector<2x8xf32>
    %31 = vector.extract_strided_slice %30 {offsets = [0, 0], sizes = [1, 8], strides = [1, 1]} : vector<2x8xf32> to vector<1x8xf32>
    %c0_17 = arith.constant 0 : index
    %c0_18 = arith.constant 0 : index
    %32 = vector.load %arg3[%c0_17, %c0_18] : memref<16x8xf32, #tpu.memory_space<vmem>>, vector<1x8xf32>
    tpu.vector_store %arg3[%c0_17, %c0_18], %31 {strides = array<i32>} : memref<16x8xf32, #tpu.memory_space<vmem>>, vector<1x8xf32>,
    %33 = vector.extract_strided_slice %30 {offsets = [1, 0], sizes = [1, 8], strides = [1, 1]} : vector<2x8xf32> to vector<1x8xf32>
    %c8_19 = arith.constant 8 : index
    %c0_20 = arith.constant 0 : index
    %34 = vector.load %arg3[%c8_19, %c0_20] : memref<16x8xf32, #tpu.memory_space<vmem>>, vector<1x8xf32>
    tpu.vector_store %arg3[%c8_19, %c0_20], %33 {strides = array<i32>} : memref<16x8xf32, #tpu.memory_space<vmem>>, vector<1x8xf32>,
    %35 = vector.extract_strided_slice %18 {offsets = [2, 0], sizes = [2, 8], strides = [1, 1]} : vector<16x8xf32> to vector<2x8xf32>
    %cst_21 = arith.constant dense<0.000000e+00> : vector<2x8xf32>
    %36 = tpu.matmul %24, %2, %cst_21 {dimension_numbers = #tpu.dot_dimension_numbers<[1], [0], [0], [1], [0, 0, 1, 1], [], []>} : vector<2x8xf32>, vector<8x8xf32>, vector<2x8xf32> -> vector<2x8xf32>
    %37 = arith.addf %35, %36 : vector<2x8xf32>
    %38 = math.tanh %37 : vector<2x8xf32>
    %cst_22 = arith.constant dense<0.000000e+00> : vector<2x8xf32>
    %39 = tpu.matmul %38, %3, %cst_22 {dimension_numbers = #tpu.dot_dimension_numbers<[1], [0], [0], [1], [0, 0, 1, 1], [], []>} : vector<2x8xf32>, vector<8x8xf32>, vector<2x8xf32> -> vector<2x8xf32>
    %cst_23 = arith.constant dense<0.000000e+00> : vector<2x8xf32>
    %40 = tpu.matmul %30, %4, %cst_23 {dimension_numbers = #tpu.dot_dimension_numbers<[1], [0], [0], [1], [0, 0, 1, 1], [], []>} : vector<2x8xf32>, vector<8x8xf32>, vector<2x8xf32> -> vector<2x8xf32>
    %41 = arith.addf %39, %40 : vector<2x8xf32>
    %42 = vector.broadcast %7 : vector<1x8xf32> to vector<2x8xf32>
    %43 = arith.addf %41, %42 : vector<2x8xf32>
    %44 = math.tanh %43 : vector<2x8xf32>
    %45 = vector.extract_strided_slice %44 {offsets = [0, 0], sizes = [1, 8], strides = [1, 1]} : vector<2x8xf32> to vector<1x8xf32>
    %c1 = arith.constant 1 : index
    %c0_24 = arith.constant 0 : index
    %46 = vector.load %arg3[%c1, %c0_24] : memref<16x8xf32, #tpu.memory_space<vmem>>, vector<1x8xf32>
    tpu.vector_store %arg3[%c1, %c0_24], %45 {strides = array<i32>} : memref<16x8xf32, #tpu.memory_space<vmem>>, vector<1x8xf32>,
    %47 = vector.extract_strided_slice %44 {offsets = [1, 0], sizes = [1, 8], strides = [1, 1]} : vector<2x8xf32> to vector<1x8xf32>
    %c9 = arith.constant 9 : index
    %c0_25 = arith.constant 0 : index
    %48 = vector.load %arg3[%c9, %c0_25] : memref<16x8xf32, #tpu.memory_space<vmem>>, vector<1x8xf32>
    tpu.vector_store %arg3[%c9, %c0_25], %47 {strides = array<i32>} : memref<16x8xf32, #tpu.memory_space<vmem>>, vector<1x8xf32>,
    %49 = vector.extract_strided_slice %18 {offsets = [4, 0], sizes = [2, 8], strides = [1, 1]} : vector<16x8xf32> to vector<2x8xf32>
    %cst_26 = arith.constant dense<0.000000e+00> : vector<2x8xf32>
    %50 = tpu.matmul %38, %2, %cst_26 {dimension_numbers = #tpu.dot_dimension_numbers<[1], [0], [0], [1], [0, 0, 1, 1], [], []>} : vector<2x8xf32>, vector<8x8xf32>, vector<2x8xf32> -> vector<2x8xf32>
    %51 = arith.addf %49, %50 : vector<2x8xf32>
    %52 = math.tanh %51 : vector<2x8xf32>
    %cst_27 = arith.constant dense<0.000000e+00> : vector<2x8xf32>
    %53 = tpu.matmul %52, %3, %cst_27 {dimension_numbers = #tpu.dot_dimension_numbers<[1], [0], [0], [1], [0, 0, 1, 1], [], []>} : vector<2x8xf32>, vector<8x8xf32>, vector<2x8xf32> -> vector<2x8xf32>
    %cst_28 = arith.constant dense<0.000000e+00> : vector<2x8xf32>
    %54 = tpu.matmul %44, %4, %cst_28 {dimension_numbers = #tpu.dot_dimension_numbers<[1], [0], [0], [1], [0, 0, 1, 1], [], []>} : vector<2x8xf32>, vector<8x8xf32>, vector<2x8xf32> -> vector<2x8xf32>
    %55 = arith.addf %53, %54 : vector<2x8xf32>
    %56 = vector.broadcast %7 : vector<1x8xf32> to vector<2x8xf32>
    %57 = arith.addf %55, %56 : vector<2x8xf32>
    %58 = math.tanh %57 : vector<2x8xf32>
    %59 = vector.extract_strided_slice %58 {offsets = [0, 0], sizes = [1, 8], strides = [1, 1]} : vector<2x8xf32> to vector<1x8xf32>
    %c2 = arith.constant 2 : index
    %c0_29 = arith.constant 0 : index
    %60 = vector.load %arg3[%c2, %c0_29] : memref<16x8xf32, #tpu.memory_space<vmem>>, vector<1x8xf32>
    tpu.vector_store %arg3[%c2, %c0_29], %59 {strides = array<i32>} : memref<16x8xf32, #tpu.memory_space<vmem>>, vector<1x8xf32>,
    %61 = vector.extract_strided_slice %58 {offsets = [1, 0], sizes = [1, 8], strides = [1, 1]} : vector<2x8xf32> to vector<1x8xf32>
    %c10 = arith.constant 10 : index
    %c0_30 = arith.constant 0 : index
    %62 = vector.load %arg3[%c10, %c0_30] : memref<16x8xf32, #tpu.memory_space<vmem>>, vector<1x8xf32>
    tpu.vector_store %arg3[%c10, %c0_30], %61 {strides = array<i32>} : memref<16x8xf32, #tpu.memory_space<vmem>>, vector<1x8xf32>,
    %63 = vector.extract_strided_slice %18 {offsets = [6, 0], sizes = [2, 8], strides = [1, 1]} : vector<16x8xf32> to vector<2x8xf32>
    %cst_31 = arith.constant dense<0.000000e+00> : vector<2x8xf32>
    %64 = tpu.matmul %52, %2, %cst_31 {dimension_numbers = #tpu.dot_dimension_numbers<[1], [0], [0], [1], [0, 0, 1, 1], [], []>} : vector<2x8xf32>, vector<8x8xf32>, vector<2x8xf32> -> vector<2x8xf32>
    %65 = arith.addf %63, %64 : vector<2x8xf32>
    %66 = math.tanh %65 : vector<2x8xf32>
    %cst_32 = arith.constant dense<0.000000e+00> : vector<2x8xf32>
    %67 = tpu.matmul %66, %3, %cst_32 {dimension_numbers = #tpu.dot_dimension_numbers<[1], [0], [0], [1], [0, 0, 1, 1], [], []>} : vector<2x8xf32>, vector<8x8xf32>, vector<2x8xf32> -> vector<2x8xf32>
    %cst_33 = arith.constant dense<0.000000e+00> : vector<2x8xf32>
    %68 = tpu.matmul %58, %4, %cst_33 {dimension_numbers = #tpu.dot_dimension_numbers<[1], [0], [0], [1], [0, 0, 1, 1], [], []>} : vector<2x8xf32>, vector<8x8xf32>, vector<2x8xf32> -> vector<2x8xf32>
    %69 = arith.addf %67, %68 : vector<2x8xf32>
    %70 = vector.broadcast %7 : vector<1x8xf32> to vector<2x8xf32>
    %71 = arith.addf %69, %70 : vector<2x8xf32>
    %72 = math.tanh %71 : vector<2x8xf32>
    %73 = vector.extract_strided_slice %72 {offsets = [0, 0], sizes = [1, 8], strides = [1, 1]} : vector<2x8xf32> to vector<1x8xf32>
    %c3 = arith.constant 3 : index
    %c0_34 = arith.constant 0 : index
    %74 = vector.load %arg3[%c3, %c0_34] : memref<16x8xf32, #tpu.memory_space<vmem>>, vector<1x8xf32>
    tpu.vector_store %arg3[%c3, %c0_34], %73 {strides = array<i32>} : memref<16x8xf32, #tpu.memory_space<vmem>>, vector<1x8xf32>,
    %75 = vector.extract_strided_slice %72 {offsets = [1, 0], sizes = [1, 8], strides = [1, 1]} : vector<2x8xf32> to vector<1x8xf32>
    %c11 = arith.constant 11 : index
    %c0_35 = arith.constant 0 : index
    %76 = vector.load %arg3[%c11, %c0_35] : memref<16x8xf32, #tpu.memory_space<vmem>>, vector<1x8xf32>
    tpu.vector_store %arg3[%c11, %c0_35], %75 {strides = array<i32>} : memref<16x8xf32, #tpu.memory_space<vmem>>, vector<1x8xf32>,
    %77 = vector.extract_strided_slice %18 {offsets = [8, 0], sizes = [2, 8], strides = [1, 1]} : vector<16x8xf32> to vector<2x8xf32>
    %cst_36 = arith.constant dense<0.000000e+00> : vector<2x8xf32>
    %78 = tpu.matmul %66, %2, %cst_36 {dimension_numbers = #tpu.dot_dimension_numbers<[1], [0], [0], [1], [0, 0, 1, 1], [], []>} : vector<2x8xf32>, vector<8x8xf32>, vector<2x8xf32> -> vector<2x8xf32>
    %79 = arith.addf %77, %78 : vector<2x8xf32>
    %80 = math.tanh %79 : vector<2x8xf32>
    %cst_37 = arith.constant dense<0.000000e+00> : vector<2x8xf32>
    %81 = tpu.matmul %80, %3, %cst_37 {dimension_numbers = #tpu.dot_dimension_numbers<[1], [0], [0], [1], [0, 0, 1, 1], [], []>} : vector<2x8xf32>, vector<8x8xf32>, vector<2x8xf32> -> vector<2x8xf32>
    %cst_38 = arith.constant dense<0.000000e+00> : vector<2x8xf32>
    %82 = tpu.matmul %72, %4, %cst_38 {dimension_numbers = #tpu.dot_dimension_numbers<[1], [0], [0], [1], [0, 0, 1, 1], [], []>} : vector<2x8xf32>, vector<8x8xf32>, vector<2x8xf32> -> vector<2x8xf32>
    %83 = arith.addf %81, %82 : vector<2x8xf32>
    %84 = vector.broadcast %7 : vector<1x8xf32> to vector<2x8xf32>
    %85 = arith.addf %83, %84 : vector<2x8xf32>
    %86 = math.tanh %85 : vector<2x8xf32>
    %87 = vector.extract_strided_slice %86 {offsets = [0, 0], sizes = [1, 8], strides = [1, 1]} : vector<2x8xf32> to vector<1x8xf32>
    %c4 = arith.constant 4 : index
    %c0_39 = arith.constant 0 : index
    %88 = vector.load %arg3[%c4, %c0_39] : memref<16x8xf32, #tpu.memory_space<vmem>>, vector<1x8xf32>
    tpu.vector_store %arg3[%c4, %c0_39], %87 {strides = array<i32>} : memref<16x8xf32, #tpu.memory_space<vmem>>, vector<1x8xf32>,
    %89 = vector.extract_strided_slice %86 {offsets = [1, 0], sizes = [1, 8], strides = [1, 1]} : vector<2x8xf32> to vector<1x8xf32>
    %c12 = arith.constant 12 : index
    %c0_40 = arith.constant 0 : index
    %90 = vector.load %arg3[%c12, %c0_40] : memref<16x8xf32, #tpu.memory_space<vmem>>, vector<1x8xf32>
    tpu.vector_store %arg3[%c12, %c0_40], %89 {strides = array<i32>} : memref<16x8xf32, #tpu.memory_space<vmem>>, vector<1x8xf32>,
    %91 = vector.extract_strided_slice %18 {offsets = [10, 0], sizes = [2, 8], strides = [1, 1]} : vector<16x8xf32> to vector<2x8xf32>
    %cst_41 = arith.constant dense<0.000000e+00> : vector<2x8xf32>
    %92 = tpu.matmul %80, %2, %cst_41 {dimension_numbers = #tpu.dot_dimension_numbers<[1], [0], [0], [1], [0, 0, 1, 1], [], []>} : vector<2x8xf32>, vector<8x8xf32>, vector<2x8xf32> -> vector<2x8xf32>
    %93 = arith.addf %91, %92 : vector<2x8xf32>
    %94 = math.tanh %93 : vector<2x8xf32>
    %cst_42 = arith.constant dense<0.000000e+00> : vector<2x8xf32>
    %95 = tpu.matmul %94, %3, %cst_42 {dimension_numbers = #tpu.dot_dimension_numbers<[1], [0], [0], [1], [0, 0, 1, 1], [], []>} : vector<2x8xf32>, vector<8x8xf32>, vector<2x8xf32> -> vector<2x8xf32>
    %cst_43 = arith.constant dense<0.000000e+00> : vector<2x8xf32>
    %96 = tpu.matmul %86, %4, %cst_43 {dimension_numbers = #tpu.dot_dimension_numbers<[1], [0], [0], [1], [0, 0, 1, 1], [], []>} : vector<2x8xf32>, vector<8x8xf32>, vector<2x8xf32> -> vector<2x8xf32>
    %97 = arith.addf %95, %96 : vector<2x8xf32>
    %98 = vector.broadcast %7 : vector<1x8xf32> to vector<2x8xf32>
    %99 = arith.addf %97, %98 : vector<2x8xf32>
    %100 = math.tanh %99 : vector<2x8xf32>
    %101 = vector.extract_strided_slice %100 {offsets = [0, 0], sizes = [1, 8], strides = [1, 1]} : vector<2x8xf32> to vector<1x8xf32>
    %c5 = arith.constant 5 : index
    %c0_44 = arith.constant 0 : index
    %102 = vector.load %arg3[%c5, %c0_44] : memref<16x8xf32, #tpu.memory_space<vmem>>, vector<1x8xf32>
    tpu.vector_store %arg3[%c5, %c0_44], %101 {strides = array<i32>} : memref<16x8xf32, #tpu.memory_space<vmem>>, vector<1x8xf32>,
    %103 = vector.extract_strided_slice %100 {offsets = [1, 0], sizes = [1, 8], strides = [1, 1]} : vector<2x8xf32> to vector<1x8xf32>
    %c13 = arith.constant 13 : index
    %c0_45 = arith.constant 0 : index
    %104 = vector.load %arg3[%c13, %c0_45] : memref<16x8xf32, #tpu.memory_space<vmem>>, vector<1x8xf32>
    tpu.vector_store %arg3[%c13, %c0_45], %103 {strides = array<i32>} : memref<16x8xf32, #tpu.memory_space<vmem>>, vector<1x8xf32>,
    %105 = vector.extract_strided_slice %18 {offsets = [12, 0], sizes = [2, 8], strides = [1, 1]} : vector<16x8xf32> to vector<2x8xf32>
    %cst_46 = arith.constant dense<0.000000e+00> : vector<2x8xf32>
    %106 = tpu.matmul %94, %2, %cst_46 {dimension_numbers = #tpu.dot_dimension_numbers<[1], [0], [0], [1], [0, 0, 1, 1], [], []>} : vector<2x8xf32>, vector<8x8xf32>, vector<2x8xf32> -> vector<2x8xf32>
    %107 = arith.addf %105, %106 : vector<2x8xf32>
    %108 = math.tanh %107 : vector<2x8xf32>
    %cst_47 = arith.constant dense<0.000000e+00> : vector<2x8xf32>
    %109 = tpu.matmul %108, %3, %cst_47 {dimension_numbers = #tpu.dot_dimension_numbers<[1], [0], [0], [1], [0, 0, 1, 1], [], []>} : vector<2x8xf32>, vector<8x8xf32>, vector<2x8xf32> -> vector<2x8xf32>
    %cst_48 = arith.constant dense<0.000000e+00> : vector<2x8xf32>
    %110 = tpu.matmul %100, %4, %cst_48 {dimension_numbers = #tpu.dot_dimension_numbers<[1], [0], [0], [1], [0, 0, 1, 1], [], []>} : vector<2x8xf32>, vector<8x8xf32>, vector<2x8xf32> -> vector<2x8xf32>
    %111 = arith.addf %109, %110 : vector<2x8xf32>
    %112 = vector.broadcast %7 : vector<1x8xf32> to vector<2x8xf32>
    %113 = arith.addf %111, %112 : vector<2x8xf32>
    %114 = math.tanh %113 : vector<2x8xf32>
    %115 = vector.extract_strided_slice %114 {offsets = [0, 0], sizes = [1, 8], strides = [1, 1]} : vector<2x8xf32> to vector<1x8xf32>
    %c6 = arith.constant 6 : index
    %c0_49 = arith.constant 0 : index
    %116 = vector.load %arg3[%c6, %c0_49] : memref<16x8xf32, #tpu.memory_space<vmem>>, vector<1x8xf32>
    tpu.vector_store %arg3[%c6, %c0_49], %115 {strides = array<i32>} : memref<16x8xf32, #tpu.memory_space<vmem>>, vector<1x8xf32>,
    %117 = vector.extract_strided_slice %114 {offsets = [1, 0], sizes = [1, 8], strides = [1, 1]} : vector<2x8xf32> to vector<1x8xf32>
    %c14 = arith.constant 14 : index
    %c0_50 = arith.constant 0 : index
    %118 = vector.load %arg3[%c14, %c0_50] : memref<16x8xf32, #tpu.memory_space<vmem>>, vector<1x8xf32>
    tpu.vector_store %arg3[%c14, %c0_50], %117 {strides = array<i32>} : memref<16x8xf32, #tpu.memory_space<vmem>>, vector<1x8xf32>,
    %119 = vector.extract_strided_slice %18 {offsets = [14, 0], sizes = [2, 8], strides = [1, 1]} : vector<16x8xf32> to vector<2x8xf32>
    %cst_51 = arith.constant dense<0.000000e+00> : vector<2x8xf32>
    %120 = tpu.matmul %108, %2, %cst_51 {dimension_numbers = #tpu.dot_dimension_numbers<[1], [0], [0], [1], [0, 0, 1, 1], [], []>} : vector<2x8xf32>, vector<8x8xf32>, vector<2x8xf32> -> vector<2x8xf32>
    %121 = arith.addf %119, %120 : vector<2x8xf32>
    %122 = math.tanh %121 : vector<2x8xf32>
    %cst_52 = arith.constant dense<0.000000e+00> : vector<2x8xf32>
    %123 = tpu.matmul %122, %3, %cst_52 {dimension_numbers = #tpu.dot_dimension_numbers<[1], [0], [0], [1], [0, 0, 1, 1], [], []>} : vector<2x8xf32>, vector<8x8xf32>, vector<2x8xf32> -> vector<2x8xf32>
    %cst_53 = arith.constant dense<0.000000e+00> : vector<2x8xf32>
    %124 = tpu.matmul %114, %4, %cst_53 {dimension_numbers = #tpu.dot_dimension_numbers<[1], [0], [0], [1], [0, 0, 1, 1], [], []>} : vector<2x8xf32>, vector<8x8xf32>, vector<2x8xf32> -> vector<2x8xf32>
    %125 = arith.addf %123, %124 : vector<2x8xf32>
    %126 = vector.broadcast %7 : vector<1x8xf32> to vector<2x8xf32>
    %127 = arith.addf %125, %126 : vector<2x8xf32>
    %128 = math.tanh %127 : vector<2x8xf32>
    %129 = vector.extract_strided_slice %128 {offsets = [0, 0], sizes = [1, 8], strides = [1, 1]} : vector<2x8xf32> to vector<1x8xf32>
    %c7 = arith.constant 7 : index
    %c0_54 = arith.constant 0 : index
    %130 = vector.load %arg3[%c7, %c0_54] : memref<16x8xf32, #tpu.memory_space<vmem>>, vector<1x8xf32>
    tpu.vector_store %arg3[%c7, %c0_54], %129 {strides = array<i32>} : memref<16x8xf32, #tpu.memory_space<vmem>>, vector<1x8xf32>,
    %131 = vector.extract_strided_slice %128 {offsets = [1, 0], sizes = [1, 8], strides = [1, 1]} : vector<2x8xf32> to vector<1x8xf32>
    %c15 = arith.constant 15 : index
    %c0_55 = arith.constant 0 : index
    %132 = vector.load %arg3[%c15, %c0_55] : memref<16x8xf32, #tpu.memory_space<vmem>>, vector<1x8xf32>
    tpu.vector_store %arg3[%c15, %c0_55], %131 {strides = array<i32>} : memref<16x8xf32, #tpu.memory_space<vmem>>, vector<1x8xf32>,
    %c0_56 = arith.constant 0 : index
    %c0_57 = arith.constant 0 : index
    %133 = vector.load %arg3[%c0_56, %c0_57] : memref<16x8xf32, #tpu.memory_space<vmem>>, vector<16x8xf32>
    %cst_58 = arith.constant dense<0.000000e+00> : vector<16x4xf32>
    %134 = tpu.matmul %133, %5, %cst_58 {dimension_numbers = #tpu.dot_dimension_numbers<[1], [0], [0], [1], [0, 0, 1, 1], [], []>} : vector<16x8xf32>, vector<8x4xf32>, vector<16x4xf32> -> vector<16x4xf32>
    %135 = vector.broadcast %8 : vector<1x4xf32> to vector<16x4xf32>
    %136 = arith.addf %134, %135 : vector<16x4xf32>
    %c0_59 = arith.constant 0 : index
    %c0_60 = arith.constant 0 : index
    %137 = vector.load %arg2[%c0_59, %c0_60] : memref<16x4xf32, #tpu.memory_space<vmem>>, vector<16x4xf32>
    tpu.vector_store %arg2[%c0_59, %c0_60], %136 {strides = array<i32>} : memref<16x4xf32, #tpu.memory_space<vmem>>, vector<16x4xf32>,
    return
  }
}

</mosaic_0001>

<llo_original>
// kernel: model_forward.1
$region0: #{model_forward.1}
  #allocation0 [shape = 'u32[]', space=smem, size = 0x4, offset = 0x4, fixed_abs, tag = 'smem constant byte address 0x4 - core index']
  #allocation1 [shape = 'u32[144,128]{1,0:T(1,128)}', space=vmem, size = 0x12000, scoped, tag = 'internal scratch']
  #allocation2 [shape = 'f32[16,8]{1,0:T(8,128)}', space=vmem, size = 0x2000, scoped, tag = 'scratch operand']
  %s0 = inlined_call_operand.vmem [shape: s32[16,1], index: 0, kind: input, shape index: {}]
  %s1 = inlined_call_operand.hbm [shape: f32[64,128], index: 1, kind: input, shape index: {}]
  %s2 = inlined_call_operand.vmem [shape: f32[16,4], index: 2, kind: output, shape index: {}]
  %s3 = sld [smem:[#allocation0]]
  $region22: #{model_forward.1} parent=0
    _
  %s5 = ssub.s32 1, %s3
  %s6 = scalar_select 0, %s5, %s3
  $region1: #{model_forward.1} parent=0
    #allocation3 [shape = 'u8[32768]{0}', space=vmem, size = 0x8000, scoped, tag = 'input window, operand 1, single buffered']
    #allocation4 [shape = 's32[1]{0}', space=sflag, size = 0x4, scoped, tag = 'scoped memory for model_forward.1']
    %7 = vsyncpa [#allocation4], 0
    // Predicated region
    $region2: #{model_forward.1} parent=1 // pred_check
      _
    $region3: #{model_forward.1} parent=1 // pred_check_branch
      %9 = sbr.rel (0) target = $region5
    $region4: #{model_forward.1} parent=1 // pred_region
      _
    $region5: #{model_forward.1} parent=1 // pred_fallthru
      _
    // Predicated region
    $region6: #{model_forward.1} parent=1 // pred_check
      _
    $region7: #{model_forward.1} parent=1 // pred_check_branch
      %11 = sbr.rel (0) target = $region9
    $region8: #{model_forward.1} parent=1 // pred_region
      %s13 = ssub.s32 1024, 1024
      %14 = vsyncadd [#allocation4], %s13
      %s15 = sshll.u32 [#allocation3], 4
      %s16 = int_to_ptr.vmem [resolvable:$true] %s15
      %21 = dma.hbm_to_vmem [thread:$0]  %s1, 1024, %s16, [#allocation4], 128, 128, 8
    $region9: #{model_forward.1} parent=1 // pred_fallthru
      _
    // Predicated region
    $region10: #{model_forward.1} parent=1 // pred_check
      _
    $region11: #{model_forward.1} parent=1 // pred_check_branch
      %23 = sbr.rel (0) target = $region13
    $region12: #{model_forward.1} parent=1 // pred_region
      %24 = dma.done [#allocation4], 1024
    $region13: #{model_forward.1} parent=1 // pred_fallthru
      _
    %v25 = vld [vmem:[#allocation3] sm:$0xf]
    %v26 = vld [vmem:[#allocation3 + $0x8] sm:$0xff]
    %v27 = vld [vmem:[#allocation3 + $0x10] sm:$0x3]
    %v28 = vld [vmem:[#allocation3 + $0x18] sm:$0xff]
    %v29 = vld [vmem:[#allocation3 + $0x20] sm:$0xff]
    %v30 = vld [vmem:[#allocation3 + $0x28] sm:$0xff]
    %v31 = vld [vmem:[#allocation3 + $0x30] sm:$0xff]
    %v32 = vld [vmem:[#allocation3 + $0x38] sm:$0x1]
    %v33 = vld [vmem:[#allocation3 + $0x39] sm:$0x1]
    %v34 = vld [vmem:[#allocation3 + $0x3a] sm:$0x1]
    %v35 = vld [vmem:[%s0] sm:$0xff]
    %v36 = vld [vmem:[%s0 + $0x8] sm:$0xff]
    %v37 = vlaneseq
    %v38 = vand.u32 %v37, 127
    %39 = vset.pattern.permute.xlu0 0
    %40 = vperm.xlu0 %39, %v35
    %v41 = vpop.permute.xlu0 %40
    %42 = vset.pattern.permute.xlu0 0
    %43 = vperm.xlu0 %42, %v36
    %v44 = vpop.permute.xlu0 %43
    %vm45 = vcmp.eq.s32.totalorder %v38, %v41
    %vm46 = vcmp.eq.s32.totalorder %v38, %v44
    %v47 = vsel %vm45, 1, 0
    %v48 = vsel %vm46, 1, 0
    %v49 = vcvt.s32.f32 %v47
    %v50 = vcvt.s32.f32 %v48
    %vm51 = vcmask 31744
    %v53 = vsel %vm51, %v49, 0
    %v56 = vsel %vm51, %v50, 0
    %vm58 = vcmask 1043456
    %v60 = vsel %vm58, %v25, 0
    %62 = vmatprep.subr.mxu0 0.0
    %63 = vmatpush1.msra.mxu0 %v60
    %64 = vmatprep.subr.mxu0 0.0
    %65 = vmatpush1.msra.mxu0 0.0
    %66 = vmatprep.subr.mxu0 0.0
    %67 = vmatpush1.msra.mxu0 0.0
    %68 = vmatprep.subr.mxu0 0.0
    %69 = vmatpush1.msra.mxu0 0.0
    %70 = vmatprep.subr.mxu0 0.0
    %71 = vmatpush1.msra.mxu0 0.0
    %72 = vmatprep.subr.mxu0 0.0
    %73 = vmatpush1.msra.mxu0 0.0
    %74 = vmatprep.subr.mxu0 0.0
    %75 = vmatpush1.msra.mxu0 0.0
    %76 = vmatprep.subr.mxu0 0.0
    %77 = vmatpush1.msra.mxu0 0.0
    %78 = vmatprep.subr.mxu0 0.0
    %79 = vmatpush1.msra.mxu0 0.0
    %80 = vmatprep.subr.mxu0 0.0
    %81 = vmatpush1.msra.mxu0 0.0
    %82 = vmatprep.subr.mxu0 0.0
    %83 = vmatpush1.msra.mxu0 0.0
    %84 = vmatprep.subr.mxu0 0.0
    %85 = vmatpush1.msra.mxu0 0.0
    %86 = vmatprep.subr.mxu0 0.0
    %87 = vmatpush1.msra.mxu0 0.0
    %88 = vmatprep.subr.mxu0 0.0
    %89 = vmatpush1.msra.mxu0 0.0
    %90 = vmatprep.subr.mxu0 0.0
    %91 = vmatpush1.msra.mxu0 0.0
    %92 = vmatprep.subr.mxu0 0.0
    %93 = vmatpush1.msra.mxu0 0.0
    %94 = vmatprep.subr.mxu0 0.0
    %95 = vmatpush1.msra.mxu0 0.0
    %96 = vmatprep.subr.mxu0 0.0
    %97 = vmatpush1.msra.mxu0 0.0
    %98 = vmatprep.subr.mxu0 0.0
    %99 = vmatpush1.msra.mxu0 0.0
    %100 = vmatprep.subr.mxu0 0.0
    %101 = vmatpush1.msra.mxu0 0.0
    %102 = vmatprep.subr.mxu0 0.0
    %103 = vmatpush1.msra.mxu0 0.0
    %104 = vmatprep.subr.mxu0 0.0
    %105 = vmatpush1.msra.mxu0 0.0
    %106 = vmatprep.subr.mxu0 0.0
    %107 = vmatpush1.msra.mxu0 0.0
    %108 = vmatprep.subr.mxu0 0.0
    %109 = vmatpush1.msra.mxu0 0.0
    %110 = vmatprep.subr.mxu0 0.0
    %111 = vmatpush1.msra.mxu0 0.0
    %112 = vmatprep.subr.mxu0 0.0
    %113 = vmatpush1.msra.mxu0 0.0
    %114 = vmatprep.subr.mxu0 0.0
    %115 = vmatpush1.msra.mxu0 0.0
    %116 = vmatprep.subr.mxu0 0.0
    %117 = vmatpush1.msra.mxu0 0.0
    %118 = vmatprep.subr.mxu0 0.0
    %119 = vmatpush1.msra.mxu0 0.0
    %120 = vmatprep.subr.mxu0 0.0
    %121 = vmatpush1.msra.mxu0 0.0
    %122 = vmatprep.subr.mxu0 0.0
    %123 = vmatpush1.msra.mxu0 0.0
    %124 = vmatprep.subr.mxu0 0.0
    %125 = vmatpush1.msra.mxu0 0.0
    %126 = vmatprep.mubr.f32.mxu0 0.0
    %127 = vmatmul.mubr.f32.gmra.mrb[0].mxu0 %v53
    %v128 = vpop.f32.mrb[0].mxu0
    %v129 = vadd.f32 0.0, %v128
    %v130 = vpop.f32.mrb[0].mxu0
    %131 = vmatprep.mubr.f32.mxu0 0.0
    %132 = vmatmul.mubr.f32.gmra.mrb[0].mxu0 %v56
    %v133 = vpop.f32.mrb[0].mxu0
    %v134 = vadd.f32 0.0, %v133
    %v135 = vpop.f32.mrb[0].mxu0
    %136 = vdwg.mxu0
    %v137 = vlaneseq
    %v138 = vshrl.u32 %v137, 7
    %v139 = vsub.s32 0, %v138
    %v140 = vrot.slane %v32, %v139
    %vm141 = vcmask 80896
    %v143 = vsel %vm141, %v129, 0
    %v146 = vsel %vm141, %v134, 0
    %vm148 = vcmask 1041408
    %v150 = vsel %vm148, %v27, 0
    %152 = vmatprep.subr.mxu0 0.0
    %153 = vmatpush1.msra.mxu0 %v26
    %154 = vmatprep.subr.mxu0 0.0
    %155 = vmatpush1.msra.mxu0 %v150
    %156 = vmatprep.subr.mxu0 0.0
    %157 = vmatpush1.msra.mxu0 0.0
    %158 = vmatprep.subr.mxu0 0.0
    %159 = vmatpush1.msra.mxu0 0.0
    %160 = vmatprep.subr.mxu0 0.0
    %161 = vmatpush1.msra.mxu0 0.0
    %162 = vmatprep.subr.mxu0 0.0
    %163 = vmatpush1.msra.mxu0 0.0
    %164 = vmatprep.subr.mxu0 0.0
    %165 = vmatpush1.msra.mxu0 0.0
    %166 = vmatprep.subr.mxu0 0.0
    %167 = vmatpush1.msra.mxu0 0.0
    %168 = vmatprep.subr.mxu0 0.0
    %169 = vmatpush1.msra.mxu0 0.0
    %170 = vmatprep.subr.mxu0 0.0
    %171 = vmatpush1.msra.mxu0 0.0
    %172 = vmatprep.subr.mxu0 0.0
    %173 = vmatpush1.msra.mxu0 0.0
    %174 = vmatprep.subr.mxu0 0.0
    %175 = vmatpush1.msra.mxu0 0.0
    %176 = vmatprep.subr.mxu0 0.0
    %177 = vmatpush1.msra.mxu0 0.0
    %178 = vmatprep.subr.mxu0 0.0
    %179 = vmatpush1.msra.mxu0 0.0
    %180 = vmatprep.subr.mxu0 0.0
    %181 = vmatpush1.msra.mxu0 0.0
    %182 = vmatprep.subr.mxu0 0.0
    %183 = vmatpush1.msra.mxu0 0.0
    %184 = vmatprep.subr.mxu0 0.0
    %185 = vmatpush1.msra.mxu0 0.0
    %186 = vmatprep.subr.mxu0 0.0
    %187 = vmatpush1.msra.mxu0 0.0
    %188 = vmatprep.subr.mxu0 0.0
    %189 = vmatpush1.msra.mxu0 0.0
    %190 = vmatprep.subr.mxu0 0.0
    %191 = vmatpush1.msra.mxu0 0.0
    %192 = vmatprep.subr.mxu0 0.0
    %193 = vmatpush1.msra.mxu0 0.0
    %194 = vmatprep.subr.mxu0 0.0
    %195 = vmatpush1.msra.mxu0 0.0
    %196 = vmatprep.subr.mxu0 0.0
    %197 = vmatpush1.msra.mxu0 0.0
    %198 = vmatprep.subr.mxu0 0.0
    %199 = vmatpush1.msra.mxu0 0.0
    %200 = vmatprep.subr.mxu0 0.0
    %201 = vmatpush1.msra.mxu0 0.0
    %202 = vmatprep.subr.mxu0 0.0
    %203 = vmatpush1.msra.mxu0 0.0
    %204 = vmatprep.subr.mxu0 0.0
    %205 = vmatpush1.msra.mxu0 0.0
    %206 = vmatprep.subr.mxu0 0.0
    %207 = vmatpush1.msra.mxu0 0.0
    %208 = vmatprep.subr.mxu0 0.0
    %209 = vmatpush1.msra.mxu0 0.0
    %210 = vmatprep.subr.mxu0 0.0
    %211 = vmatpush1.msra.mxu0 0.0
    %212 = vmatprep.subr.mxu0 0.0
    %213 = vmatpush1.msra.mxu0 0.0
    %214 = vmatprep.subr.mxu0 0.0
    %215 = vmatpush1.msra.mxu0 0.0
    %216 = vmatprep.mubr.f32.mxu0 0.0
    %217 = vmatmul.mubr.f32.gmra.mrb[0].mxu0 %v143
    %v218 = vpop.f32.mrb[0].mxu0
    %v219 = vadd.f32 %v140, %v218
    %v220 = vpop.f32.mrb[0].mxu0
    %221 = vmatprep.mubr.f32.mxu0 0.0
    %222 = vmatmul.mubr.f32.gmra.mrb[0].mxu0 %v146
    %v223 = vpop.f32.mrb[0].mxu0
    %v224 = vadd.f32 %v140, %v223
    %v225 = vpop.f32.mrb[0].mxu0
    %226 = vdwg.mxu0
    %vm227 = vcmask 64512
    %v229 = vsel %vm227, 0.0, 0
    %231 = vmatprep.subr.mxu0 0.0
    %232 = vmatpush1.msra.mxu0 %v28
    %233 = vmatprep.subr.mxu0 0.0
    %234 = vmatpush1.msra.mxu0 0.0
    %235 = vmatprep.subr.mxu0 0.0
    %236 = vmatpush1.msra.mxu0 0.0
    %237 = vmatprep.subr.mxu0 0.0
    %238 = vmatpush1.msra.mxu0 0.0
    %239 = vmatprep.subr.mxu0 0.0
    %240 = vmatpush1.msra.mxu0 0.0
    %241 = vmatprep.subr.mxu0 0.0
    %242 = vmatpush1.msra.mxu0 0.0
    %243 = vmatprep.subr.mxu0 0.0
    %244 = vmatpush1.msra.mxu0 0.0
    %245 = vmatprep.subr.mxu0 0.0
    %246 = vmatpush1.msra.mxu0 0.0
    %247 = vmatprep.subr.mxu0 0.0
    %248 = vmatpush1.msra.mxu0 0.0
    %249 = vmatprep.subr.mxu0 0.0
    %250 = vmatpush1.msra.mxu0 0.0
    %251 = vmatprep.subr.mxu0 0.0
    %252 = vmatpush1.msra.mxu0 0.0
    %253 = vmatprep.subr.mxu0 0.0
    %254 = vmatpush1.msra.mxu0 0.0
    %255 = vmatprep.subr.mxu0 0.0
    %256 = vmatpush1.msra.mxu0 0.0
    %257 = vmatprep.subr.mxu0 0.0
    %258 = vmatpush1.msra.mxu0 0.0
    %259 = vmatprep.subr.mxu0 0.0
    %260 = vmatpush1.msra.mxu0 0.0
    %261 = vmatprep.subr.mxu0 0.0
    %262 = vmatpush1.msra.mxu0 0.0
    %263 = vmatprep.subr.mxu0 0.0
    %264 = vmatpush1.msra.mxu0 0.0
    %265 = vmatprep.subr.mxu0 0.0
    %266 = vmatpush1.msra.mxu0 0.0
    %267 = vmatprep.subr.mxu0 0.0
    %268 = vmatpush1.msra.mxu0 0.0
    %269 = vmatprep.subr.mxu0 0.0
    %270 = vmatpush1.msra.mxu0 0.0
    %271 = vmatprep.subr.mxu0 0.0
    %272 = vmatpush1.msra.mxu0 0.0
    %273 = vmatprep.subr.mxu0 0.0
    %274 = vmatpush1.msra.mxu0 0.0
    %275 = vmatprep.subr.mxu0 0.0
    %276 = vmatpush1.msra.mxu0 0.0
    %277 = vmatprep.subr.mxu0 0.0
    %278 = vmatpush1.msra.mxu0 0.0
    %279 = vmatprep.subr.mxu0 0.0
    %280 = vmatpush1.msra.mxu0 0.0
    %281 = vmatprep.subr.mxu0 0.0
    %282 = vmatpush1.msra.mxu0 0.0
    %283 = vmatprep.subr.mxu0 0.0
    %284 = vmatpush1.msra.mxu0 0.0
    %285 = vmatprep.subr.mxu0 0.0
    %286 = vmatpush1.msra.mxu0 0.0
    %287 = vmatprep.subr.mxu0 0.0
    %288 = vmatpush1.msra.mxu0 0.0
    %289 = vmatprep.subr.mxu0 0.0
    %290 = vmatpush1.msra.mxu0 0.0
    %291 = vmatprep.subr.mxu0 0.0
    %292 = vmatpush1.msra.mxu0 0.0
    %293 = vmatprep.subr.mxu0 0.0
    %294 = vmatpush1.msra.mxu0 0.0
    %295 = vmatprep.mubr.f32.mxu0 0.0
    %296 = vmatmul.mubr.f32.gmra.mrb[0].mxu0 %v229
    %v297 = vpop.f32.mrb[0].mxu0
    %v298 = vadd.f32 0.0, %v297
    %v299 = vpop.f32.mrb[0].mxu0
    %300 = vdwg.mxu0
    %v301 = vadd.f32 %v219, %v298
    %v302 = vtanh.pop %v301
    %303 = vmatprep.subr.mxu0 0.0
    %304 = vmatpush1.msra.mxu0 %v30
    %305 = vmatprep.subr.mxu0 0.0
    %306 = vmatpush1.msra.mxu0 0.0
    %307 = vmatprep.subr.mxu0 0.0
    %308 = vmatpush1.msra.mxu0 0.0
    %309 = vmatprep.subr.mxu0 0.0
    %310 = vmatpush1.msra.mxu0 0.0
    %311 = vmatprep.subr.mxu0 0.0
    %312 = vmatpush1.msra.mxu0 0.0
    %313 = vmatprep.subr.mxu0 0.0
    %314 = vmatpush1.msra.mxu0 0.0
    %315 = vmatprep.subr.mxu0 0.0
    %316 = vmatpush1.msra.mxu0 0.0
    %317 = vmatprep.subr.mxu0 0.0
    %318 = vmatpush1.msra.mxu0 0.0
    %319 = vmatprep.subr.mxu0 0.0
    %320 = vmatpush1.msra.mxu0 0.0
    %321 = vmatprep.subr.mxu0 0.0
    %322 = vmatpush1.msra.mxu0 0.0
    %323 = vmatprep.subr.mxu0 0.0
    %324 = vmatpush1.msra.mxu0 0.0
    %325 = vmatprep.subr.mxu0 0.0
    %326 = vmatpush1.msra.mxu0 0.0
    %327 = vmatprep.subr.mxu0 0.0
    %328 = vmatpush1.msra.mxu0 0.0
    %329 = vmatprep.subr.mxu0 0.0
    %330 = vmatpush1.msra.mxu0 0.0
    %331 = vmatprep.subr.mxu0 0.0
    %332 = vmatpush1.msra.mxu0 0.0
    %333 = vmatprep.subr.mxu0 0.0
    %334 = vmatpush1.msra.mxu0 0.0
    %335 = vmatprep.subr.mxu0 0.0
    %336 = vmatpush1.msra.mxu0 0.0
    %337 = vmatprep.subr.mxu0 0.0
    %338 = vmatpush1.msra.mxu0 0.0
    %339 = vmatprep.subr.mxu0 0.0
    %340 = vmatpush1.msra.mxu0 0.0
    %341 = vmatprep.subr.mxu0 0.0
    %342 = vmatpush1.msra.mxu0 0.0
    %343 = vmatprep.subr.mxu0 0.0
    %344 = vmatpush1.msra.mxu0 0.0
    %345 = vmatprep.subr.mxu0 0.0
    %346 = vmatpush1.msra.mxu0 0.0
    %347 = vmatprep.subr.mxu0 0.0
    %348 = vmatpush1.msra.mxu0 0.0
    %349 = vmatprep.subr.mxu0 0.0
    %350 = vmatpush1.msra.mxu0 0.0
    %351 = vmatprep.subr.mxu0 0.0
    %352 = vmatpush1.msra.mxu0 0.0
    %353 = vmatprep.subr.mxu0 0.0
    %354 = vmatpush1.msra.mxu0 0.0
    %355 = vmatprep.subr.mxu0 0.0
    %356 = vmatpush1.msra.mxu0 0.0
    %357 = vmatprep.subr.mxu0 0.0
    %358 = vmatpush1.msra.mxu0 0.0
    %359 = vmatprep.subr.mxu0 0.0
    %360 = vmatpush1.msra.mxu0 0.0
    %361 = vmatprep.subr.mxu0 0.0
    %362 = vmatpush1.msra.mxu0 0.0
    %363 = vmatprep.subr.mxu0 0.0
    %364 = vmatpush1.msra.mxu0 0.0
    %365 = vmatprep.subr.mxu0 0.0
    %366 = vmatpush1.msra.mxu0 0.0
    %367 = vmatprep.mubr.f32.mxu0 0.0
    %368 = vmatmul.mubr.f32.gmra.mrb[0].mxu0 %v229
    %v369 = vpop.f32.mrb[0].mxu0
    %v370 = vadd.f32 0.0, %v369
    %v371 = vpop.f32.mrb[0].mxu0
    %372 = vdwg.mxu0
    %v374 = vsel %vm227, %v302, 0
    %376 = vmatprep.subr.mxu0 0.0
    %377 = vmatpush1.msra.mxu0 %v29
    %378 = vmatprep.subr.mxu0 0.0
    %379 = vmatpush1.msra.mxu0 0.0
    %380 = vmatprep.subr.mxu0 0.0
    %381 = vmatpush1.msra.mxu0 0.0
    %382 = vmatprep.subr.mxu0 0.0
    %383 = vmatpush1.msra.mxu0 0.0
    %384 = vmatprep.subr.mxu0 0.0
    %385 = vmatpush1.msra.mxu0 0.0
    %386 = vmatprep.subr.mxu0 0.0
    %387 = vmatpush1.msra.mxu0 0.0
    %388 = vmatprep.subr.mxu0 0.0
    %389 = vmatpush1.msra.mxu0 0.0
    %390 = vmatprep.subr.mxu0 0.0
    %391 = vmatpush1.msra.mxu0 0.0
    %392 = vmatprep.subr.mxu0 0.0
    %393 = vmatpush1.msra.mxu0 0.0
    %394 = vmatprep.subr.mxu0 0.0
    %395 = vmatpush1.msra.mxu0 0.0
    %396 = vmatprep.subr.mxu0 0.0
    %397 = vmatpush1.msra.mxu0 0.0
    %398 = vmatprep.subr.mxu0 0.0
    %399 = vmatpush1.msra.mxu0 0.0
    %400 = vmatprep.subr.mxu0 0.0
    %401 = vmatpush1.msra.mxu0 0.0
    %402 = vmatprep.subr.mxu0 0.0
    %403 = vmatpush1.msra.mxu0 0.0
    %404 = vmatprep.subr.mxu0 0.0
    %405 = vmatpush1.msra.mxu0 0.0
    %406 = vmatprep.subr.mxu0 0.0
    %407 = vmatpush1.msra.mxu0 0.0
    %408 = vmatprep.subr.mxu0 0.0
    %409 = vmatpush1.msra.mxu0 0.0
    %410 = vmatprep.subr.mxu0 0.0
    %411 = vmatpush1.msra.mxu0 0.0
    %412 = vmatprep.subr.mxu0 0.0
    %413 = vmatpush1.msra.mxu0 0.0
    %414 = vmatprep.subr.mxu0 0.0
    %415 = vmatpush1.msra.mxu0 0.0
    %416 = vmatprep.subr.mxu0 0.0
    %417 = vmatpush1.msra.mxu0 0.0
    %418 = vmatprep.subr.mxu0 0.0
    %419 = vmatpush1.msra.mxu0 0.0
    %420 = vmatprep.subr.mxu0 0.0
    %421 = vmatpush1.msra.mxu0 0.0
    %422 = vmatprep.subr.mxu0 0.0
    %423 = vmatpush1.msra.mxu0 0.0
    %424 = vmatprep.subr.mxu0 0.0
    %425 = vmatpush1.msra.mxu0 0.0
    %426 = vmatprep.subr.mxu0 0.0
    %427 = vmatpush1.msra.mxu0 0.0
    %428 = vmatprep.subr.mxu0 0.0
    %429 = vmatpush1.msra.mxu0 0.0
    %430 = vmatprep.subr.mxu0 0.0
    %431 = vmatpush1.msra.mxu0 0.0
    %432 = vmatprep.subr.mxu0 0.0
    %433 = vmatpush1.msra.mxu0 0.0
    %434 = vmatprep.subr.mxu0 0.0
    %435 = vmatpush1.msra.mxu0 0.0
    %436 = vmatprep.subr.mxu0 0.0
    %437 = vmatpush1.msra.mxu0 0.0
    %438 = vmatprep.subr.mxu0 0.0
    %439 = vmatpush1.msra.mxu0 0.0
    %440 = vmatprep.mubr.f32.mxu0 0.0
    %441 = vmatmul.mubr.f32.gmra.mrb[0].mxu0 %v374
    %v442 = vpop.f32.mrb[0].mxu0
    %v443 = vadd.f32 %v370, %v442
    %v444 = vpop.f32.mrb[0].mxu0
    %445 = vdwg.mxu0
    %v446 = vlaneseq
    %v447 = vshrl.u32 %v446, 7
    %v448 = vsub.s32 0, %v447
    %v449 = vrot.slane %v33, %v448
    %v450 = vadd.f32 %v443, %v449
    %v451 = vtanh.pop %v450
    %vm452 = vcmask 57344
    %453 = vst.msk [vmem:[#allocation2] sm:$0x1] %vm452, %v451
    %vm454 = vcmask 58369
    %455 = vst.msk [vmem:[#allocation2 + $0x7] sm:$0x2] %vm454, %v451
    %456 = vmatprep.subr.mxu0 0.0
    %457 = vmatpush1.msra.mxu0 %v28
    %458 = vmatprep.subr.mxu0 0.0
    %459 = vmatpush1.msra.mxu0 0.0
    %460 = vmatprep.subr.mxu0 0.0
    %461 = vmatpush1.msra.mxu0 0.0
    %462 = vmatprep.subr.mxu0 0.0
    %463 = vmatpush1.msra.mxu0 0.0
    %464 = vmatprep.subr.mxu0 0.0
    %465 = vmatpush1.msra.mxu0 0.0
    %466 = vmatprep.subr.mxu0 0.0
    %467 = vmatpush1.msra.mxu0 0.0
    %468 = vmatprep.subr.mxu0 0.0
    %469 = vmatpush1.msra.mxu0 0.0
    %470 = vmatprep.subr.mxu0 0.0
    %471 = vmatpush1.msra.mxu0 0.0
    %472 = vmatprep.subr.mxu0 0.0
    %473 = vmatpush1.msra.mxu0 0.0
    %474 = vmatprep.subr.mxu0 0.0
    %475 = vmatpush1.msra.mxu0 0.0
    %476 = vmatprep.subr.mxu0 0.0
    %477 = vmatpush1.msra.mxu0 0.0
    %478 = vmatprep.subr.mxu0 0.0
    %479 = vmatpush1.msra.mxu0 0.0
    %480 = vmatprep.subr.mxu0 0.0
    %481 = vmatpush1.msra.mxu0 0.0
    %482 = vmatprep.subr.mxu0 0.0
    %483 = vmatpush1.msra.mxu0 0.0
    %484 = vmatprep.subr.mxu0 0.0
    %485 = vmatpush1.msra.mxu0 0.0
    %486 = vmatprep.subr.mxu0 0.0
    %487 = vmatpush1.msra.mxu0 0.0
    %488 = vmatprep.subr.mxu0 0.0
    %489 = vmatpush1.msra.mxu0 0.0
    %490 = vmatprep.subr.mxu0 0.0
    %491 = vmatpush1.msra.mxu0 0.0
    %492 = vmatprep.subr.mxu0 0.0
    %493 = vmatpush1.msra.mxu0 0.0
    %494 = vmatprep.subr.mxu0 0.0
    %495 = vmatpush1.msra.mxu0 0.0
    %496 = vmatprep.subr.mxu0 0.0
    %497 = vmatpush1.msra.mxu0 0.0
    %498 = vmatprep.subr.mxu0 0.0
    %499 = vmatpush1.msra.mxu0 0.0
    %500 = vmatprep.subr.mxu0 0.0
    %501 = vmatpush1.msra.mxu0 0.0
    %502 = vmatprep.subr.mxu0 0.0
    %503 = vmatpush1.msra.mxu0 0.0
    %504 = vmatprep.subr.mxu0 0.0
    %505 = vmatpush1.msra.mxu0 0.0
    %506 = vmatprep.subr.mxu0 0.0
    %507 = vmatpush1.msra.mxu0 0.0
    %508 = vmatprep.subr.mxu0 0.0
    %509 = vmatpush1.msra.mxu0 0.0
    %510 = vmatprep.subr.mxu0 0.0
    %511 = vmatpush1.msra.mxu0 0.0
    %512 = vmatprep.subr.mxu0 0.0
    %513 = vmatpush1.msra.mxu0 0.0
    %514 = vmatprep.subr.mxu0 0.0
    %515 = vmatpush1.msra.mxu0 0.0
    %516 = vmatprep.subr.mxu0 0.0
    %517 = vmatpush1.msra.mxu0 0.0
    %518 = vmatprep.subr.mxu0 0.0
    %519 = vmatpush1.msra.mxu0 0.0
    %520 = vmatprep.mubr.f32.mxu0 0.0
    %521 = vmatmul.mubr.f32.gmra.mrb[0].mxu0 %v374
    %v522 = vpop.f32.mrb[0].mxu0
    %v523 = vadd.f32 0.0, %v522
    %v524 = vpop.f32.mrb[0].mxu0
    %525 = vdwg.mxu0
    %v527 = vrot.slane %v523, 6
    %v529 = vadd.f32 %v219, %v527
    %v530 = vtanh.pop %v529
    %v532 = vsel %vm227, %v451, 0
    %534 = vmatprep.subr.mxu0 0.0
    %535 = vmatpush1.msra.mxu0 %v30
    %536 = vmatprep.subr.mxu0 0.0
    %537 = vmatpush1.msra.mxu0 0.0
    %538 = vmatprep.subr.mxu0 0.0
    %539 = vmatpush1.msra.mxu0 0.0
    %540 = vmatprep.subr.mxu0 0.0
    %541 = vmatpush1.msra.mxu0 0.0
    %542 = vmatprep.subr.mxu0 0.0
    %543 = vmatpush1.msra.mxu0 0.0
    %544 = vmatprep.subr.mxu0 0.0
    %545 = vmatpush1.msra.mxu0 0.0
    %546 = vmatprep.subr.mxu0 0.0
    %547 = vmatpush1.msra.mxu0 0.0
    %548 = vmatprep.subr.mxu0 0.0
    %549 = vmatpush1.msra.mxu0 0.0
    %550 = vmatprep.subr.mxu0 0.0
    %551 = vmatpush1.msra.mxu0 0.0
    %552 = vmatprep.subr.mxu0 0.0
    %553 = vmatpush1.msra.mxu0 0.0
    %554 = vmatprep.subr.mxu0 0.0
    %555 = vmatpush1.msra.mxu0 0.0
    %556 = vmatprep.subr.mxu0 0.0
    %557 = vmatpush1.msra.mxu0 0.0
    %558 = vmatprep.subr.mxu0 0.0
    %559 = vmatpush1.msra.mxu0 0.0
    %560 = vmatprep.subr.mxu0 0.0
    %561 = vmatpush1.msra.mxu0 0.0
    %562 = vmatprep.subr.mxu0 0.0
    %563 = vmatpush1.msra.mxu0 0.0
    %564 = vmatprep.subr.mxu0 0.0
    %565 = vmatpush1.msra.mxu0 0.0
    %566 = vmatprep.subr.mxu0 0.0
    %567 = vmatpush1.msra.mxu0 0.0
    %568 = vmatprep.subr.mxu0 0.0
    %569 = vmatpush1.msra.mxu0 0.0
    %570 = vmatprep.subr.mxu0 0.0
    %571 = vmatpush1.msra.mxu0 0.0
    %572 = vmatprep.subr.mxu0 0.0
    %573 = vmatpush1.msra.mxu0 0.0
    %574 = vmatprep.subr.mxu0 0.0
    %575 = vmatpush1.msra.mxu0 0.0
    %576 = vmatprep.subr.mxu0 0.0
    %577 = vmatpush1.msra.mxu0 0.0
    %578 = vmatprep.subr.mxu0 0.0
    %579 = vmatpush1.msra.mxu0 0.0
    %580 = vmatprep.subr.mxu0 0.0
    %581 = vmatpush1.msra.mxu0 0.0
    %582 = vmatprep.subr.mxu0 0.0
    %583 = vmatpush1.msra.mxu0 0.0
    %584 = vmatprep.subr.mxu0 0.0
    %585 = vmatpush1.msra.mxu0 0.0
    %586 = vmatprep.subr.mxu0 0.0
    %587 = vmatpush1.msra.mxu0 0.0
    %588 = vmatprep.subr.mxu0 0.0
    %589 = vmatpush1.msra.mxu0 0.0
    %590 = vmatprep.subr.mxu0 0.0
    %591 = vmatpush1.msra.mxu0 0.0
    %592 = vmatprep.subr.mxu0 0.0
    %593 = vmatpush1.msra.mxu0 0.0
    %594 = vmatprep.subr.mxu0 0.0
    %595 = vmatpush1.msra.mxu0 0.0
    %596 = vmatprep.subr.mxu0 0.0
    %597 = vmatpush1.msra.mxu0 0.0
    %598 = vmatprep.mubr.f32.mxu0 0.0
    %599 = vmatmul.mubr.f32.gmra.mrb[0].mxu0 %v532
    %v600 = vpop.f32.mrb[0].mxu0
    %v601 = vadd.f32 0.0, %v600
    %v602 = vpop.f32.mrb[0].mxu0
    %603 = vdwg.mxu0
    %v605 = vrot.slane %v530, 2
    %v606 = vsel %vm227, %v605, 0
    %608 = vmatprep.subr.mxu0 0.0
    %609 = vmatpush1.msra.mxu0 %v29
    %610 = vmatprep.subr.mxu0 0.0
    %611 = vmatpush1.msra.mxu0 0.0
    %612 = vmatprep.subr.mxu0 0.0
    %613 = vmatpush1.msra.mxu0 0.0
    %614 = vmatprep.subr.mxu0 0.0
    %615 = vmatpush1.msra.mxu0 0.0
    %616 = vmatprep.subr.mxu0 0.0
    %617 = vmatpush1.msra.mxu0 0.0
    %618 = vmatprep.subr.mxu0 0.0
    %619 = vmatpush1.msra.mxu0 0.0
    %620 = vmatprep.subr.mxu0 0.0
    %621 = vmatpush1.msra.mxu0 0.0
    %622 = vmatprep.subr.mxu0 0.0
    %623 = vmatpush1.msra.mxu0 0.0
    %624 = vmatprep.subr.mxu0 0.0
    %625 = vmatpush1.msra.mxu0 0.0
    %626 = vmatprep.subr.mxu0 0.0
    %627 = vmatpush1.msra.mxu0 0.0
    %628 = vmatprep.subr.mxu0 0.0
    %629 = vmatpush1.msra.mxu0 0.0
    %630 = vmatprep.subr.mxu0 0.0
    %631 = vmatpush1.msra.mxu0 0.0
    %632 = vmatprep.subr.mxu0 0.0
    %633 = vmatpush1.msra.mxu0 0.0
    %634 = vmatprep.subr.mxu0 0.0
    %635 = vmatpush1.msra.mxu0 0.0
    %636 = vmatprep.subr.mxu0 0.0
    %637 = vmatpush1.msra.mxu0 0.0
    %638 = vmatprep.subr.mxu0 0.0
    %639 = vmatpush1.msra.mxu0 0.0
    %640 = vmatprep.subr.mxu0 0.0
    %641 = vmatpush1.msra.mxu0 0.0
    %642 = vmatprep.subr.mxu0 0.0
    %643 = vmatpush1.msra.mxu0 0.0
    %644 = vmatprep.subr.mxu0 0.0
    %645 = vmatpush1.msra.mxu0 0.0
    %646 = vmatprep.subr.mxu0 0.0
    %647 = vmatpush1.msra.mxu0 0.0
    %648 = vmatprep.subr.mxu0 0.0
    %649 = vmatpush1.msra.mxu0 0.0
    %650 = vmatprep.subr.mxu0 0.0
    %651 = vmatpush1.msra.mxu0 0.0
    %652 = vmatprep.subr.mxu0 0.0
    %653 = vmatpush1.msra.mxu0 0.0
    %654 = vmatprep.subr.mxu0 0.0
    %655 = vmatpush1.msra.mxu0 0.0
    %656 = vmatprep.subr.mxu0 0.0
    %657 = vmatpush1.msra.mxu0 0.0
    %658 = vmatprep.subr.mxu0 0.0
    %659 = vmatpush1.msra.mxu0 0.0
    %660 = vmatprep.subr.mxu0 0.0
    %661 = vmatpush1.msra.mxu0 0.0
    %662 = vmatprep.subr.mxu0 0.0
    %663 = vmatpush1.msra.mxu0 0.0
    %664 = vmatprep.subr.mxu0 0.0
    %665 = vmatpush1.msra.mxu0 0.0
    %666 = vmatprep.subr.mxu0 0.0
    %667 = vmatpush1.msra.mxu0 0.0
    %668 = vmatprep.subr.mxu0 0.0
    %669 = vmatpush1.msra.mxu0 0.0
    %670 = vmatprep.subr.mxu0 0.0
    %671 = vmatpush1.msra.mxu0 0.0
    %672 = vmatprep.mubr.f32.mxu0 0.0
    %673 = vmatmul.mubr.f32.gmra.mrb[0].mxu0 %v606
    %v674 = vpop.f32.mrb[0].mxu0
    %v675 = vadd.f32 %v601, %v674
    %v676 = vpop.f32.mrb[0].mxu0
    %677 = vdwg.mxu0
    %v678 = vadd.f32 %v675, %v449
    %v679 = vtanh.pop %v678
    %680 = vst.msk [vmem:[#allocation2 + $0x1] sm:$0x1] %vm452, %v679
    %681 = vst.msk [vmem:[#allocation2 + $0x8] sm:$0x2] %vm454, %v679
    %682 = vmatprep.subr.mxu0 0.0
    %683 = vmatpush1.msra.mxu0 %v28
    %684 = vmatprep.subr.mxu0 0.0
    %685 = vmatpush1.msra.mxu0 0.0
    %686 = vmatprep.subr.mxu0 0.0
    %687 = vmatpush1.msra.mxu0 0.0
    %688 = vmatprep.subr.mxu0 0.0
    %689 = vmatpush1.msra.mxu0 0.0
    %690 = vmatprep.subr.mxu0 0.0
    %691 = vmatpush1.msra.mxu0 0.0
    %692 = vmatprep.subr.mxu0 0.0
    %693 = vmatpush1.msra.mxu0 0.0
    %694 = vmatprep.subr.mxu0 0.0
    %695 = vmatpush1.msra.mxu0 0.0
    %696 = vmatprep.subr.mxu0 0.0
    %697 = vmatpush1.msra.mxu0 0.0
    %698 = vmatprep.subr.mxu0 0.0
    %699 = vmatpush1.msra.mxu0 0.0
    %700 = vmatprep.subr.mxu0 0.0
    %701 = vmatpush1.msra.mxu0 0.0
    %702 = vmatprep.subr.mxu0 0.0
    %703 = vmatpush1.msra.mxu0 0.0
    %704 = vmatprep.subr.mxu0 0.0
    %705 = vmatpush1.msra.mxu0 0.0
    %706 = vmatprep.subr.mxu0 0.0
    %707 = vmatpush1.msra.mxu0 0.0
    %708 = vmatprep.subr.mxu0 0.0
    %709 = vmatpush1.msra.mxu0 0.0
    %710 = vmatprep.subr.mxu0 0.0
    %711 = vmatpush1.msra.mxu0 0.0
    %712 = vmatprep.subr.mxu0 0.0
    %713 = vmatpush1.msra.mxu0 0.0
    %714 = vmatprep.subr.mxu0 0.0
    %715 = vmatpush1.msra.mxu0 0.0
    %716 = vmatprep.subr.mxu0 0.0
    %717 = vmatpush1.msra.mxu0 0.0
    %718 = vmatprep.subr.mxu0 0.0
    %719 = vmatpush1.msra.mxu0 0.0
    %720 = vmatprep.subr.mxu0 0.0
    %721 = vmatpush1.msra.mxu0 0.0
    %722 = vmatprep.subr.mxu0 0.0
    %723 = vmatpush1.msra.mxu0 0.0
    %724 = vmatprep.subr.mxu0 0.0
    %725 = vmatpush1.msra.mxu0 0.0
    %726 = vmatprep.subr.mxu0 0.0
    %727 = vmatpush1.msra.mxu0 0.0
    %728 = vmatprep.subr.mxu0 0.0
    %729 = vmatpush1.msra.mxu0 0.0
    %730 = vmatprep.subr.mxu0 0.0
    %731 = vmatpush1.msra.mxu0 0.0
    %732 = vmatprep.subr.mxu0 0.0
    %733 = vmatpush1.msra.mxu0 0.0
    %734 = vmatprep.subr.mxu0 0.0
    %735 = vmatpush1.msra.mxu0 0.0
    %736 = vmatprep.subr.mxu0 0.0
    %737 = vmatpush1.msra.mxu0 0.0
    %738 = vmatprep.subr.mxu0 0.0
    %739 = vmatpush1.msra.mxu0 0.0
    %740 = vmatprep.subr.mxu0 0.0
    %741 = vmatpush1.msra.mxu0 0.0
    %742 = vmatprep.subr.mxu0 0.0
    %743 = vmatpush1.msra.mxu0 0.0
    %744 = vmatprep.subr.mxu0 0.0
    %745 = vmatpush1.msra.mxu0 0.0
    %746 = vmatprep.mubr.f32.mxu0 0.0
    %747 = vmatmul.mubr.f32.gmra.mrb[0].mxu0 %v606
    %v748 = vpop.f32.mrb[0].mxu0
    %v749 = vadd.f32 0.0, %v748
    %v750 = vpop.f32.mrb[0].mxu0
    %751 = vdwg.mxu0
    %v753 = vrot.slane %v749, 4
    %v755 = vadd.f32 %v219, %v753
    %v756 = vtanh.pop %v755
    %v758 = vsel %vm227, %v679, 0
    %760 = vmatprep.subr.mxu0 0.0
    %761 = vmatpush1.msra.mxu0 %v30
    %762 = vmatprep.subr.mxu0 0.0
    %763 = vmatpush1.msra.mxu0 0.0
    %764 = vmatprep.subr.mxu0 0.0
    %765 = vmatpush1.msra.mxu0 0.0
    %766 = vmatprep.subr.mxu0 0.0
    %767 = vmatpush1.msra.mxu0 0.0
    %768 = vmatprep.subr.mxu0 0.0
    %769 = vmatpush1.msra.mxu0 0.0
    %770 = vmatprep.subr.mxu0 0.0
    %771 = vmatpush1.msra.mxu0 0.0
    %772 = vmatprep.subr.mxu0 0.0
    %773 = vmatpush1.msra.mxu0 0.0
    %774 = vmatprep.subr.mxu0 0.0
    %775 = vmatpush1.msra.mxu0 0.0
    %776 = vmatprep.subr.mxu0 0.0
    %777 = vmatpush1.msra.mxu0 0.0
    %778 = vmatprep.subr.mxu0 0.0
    %779 = vmatpush1.msra.mxu0 0.0
    %780 = vmatprep.subr.mxu0 0.0
    %781 = vmatpush1.msra.mxu0 0.0
    %782 = vmatprep.subr.mxu0 0.0
    %783 = vmatpush1.msra.mxu0 0.0
    %784 = vmatprep.subr.mxu0 0.0
    %785 = vmatpush1.msra.mxu0 0.0
    %786 = vmatprep.subr.mxu0 0.0
    %787 = vmatpush1.msra.mxu0 0.0
    %788 = vmatprep.subr.mxu0 0.0
    %789 = vmatpush1.msra.mxu0 0.0
    %790 = vmatprep.subr.mxu0 0.0
    %791 = vmatpush1.msra.mxu0 0.0
    %792 = vmatprep.subr.mxu0 0.0
    %793 = vmatpush1.msra.mxu0 0.0
    %794 = vmatprep.subr.mxu0 0.0
    %795 = vmatpush1.msra.mxu0 0.0
    %796 = vmatprep.subr.mxu0 0.0
    %797 = vmatpush1.msra.mxu0 0.0
    %798 = vmatprep.subr.mxu0 0.0
    %799 = vmatpush1.msra.mxu0 0.0
    %800 = vmatprep.subr.mxu0 0.0
    %801 = vmatpush1.msra.mxu0 0.0
    %802 = vmatprep.subr.mxu0 0.0
    %803 = vmatpush1.msra.mxu0 0.0
    %804 = vmatprep.subr.mxu0 0.0
    %805 = vmatpush1.msra.mxu0 0.0
    %806 = vmatprep.subr.mxu0 0.0
    %807 = vmatpush1.msra.mxu0 0.0
    %808 = vmatprep.subr.mxu0 0.0
    %809 = vmatpush1.msra.mxu0 0.0
    %810 = vmatprep.subr.mxu0 0.0
    %811 = vmatpush1.msra.mxu0 0.0
    %812 = vmatprep.subr.mxu0 0.0
    %813 = vmatpush1.msra.mxu0 0.0
    %814 = vmatprep.subr.mxu0 0.0
    %815 = vmatpush1.msra.mxu0 0.0
    %816 = vmatprep.subr.mxu0 0.0
    %817 = vmatpush1.msra.mxu0 0.0
    %818 = vmatprep.subr.mxu0 0.0
    %819 = vmatpush1.msra.mxu0 0.0
    %820 = vmatprep.subr.mxu0 0.0
    %821 = vmatpush1.msra.mxu0 0.0
    %822 = vmatprep.subr.mxu0 0.0
    %823 = vmatpush1.msra.mxu0 0.0
    %824 = vmatprep.mubr.f32.mxu0 0.0
    %825 = vmatmul.mubr.f32.gmra.mrb[0].mxu0 %v758
    %v826 = vpop.f32.mrb[0].mxu0
    %v827 = vadd.f32 0.0, %v826
    %v828 = vpop.f32.mrb[0].mxu0
    %829 = vdwg.mxu0
    %v831 = vrot.slane %v756, 4
    %v832 = vsel %vm227, %v831, 0
    %834 = vmatprep.subr.mxu0 0.0
    %835 = vmatpush1.msra.mxu0 %v29
    %836 = vmatprep.subr.mxu0 0.0
    %837 = vmatpush1.msra.mxu0 0.0
    %838 = vmatprep.subr.mxu0 0.0
    %839 = vmatpush1.msra.mxu0 0.0
    %840 = vmatprep.subr.mxu0 0.0
    %841 = vmatpush1.msra.mxu0 0.0
    %842 = vmatprep.subr.mxu0 0.0
    %843 = vmatpush1.msra.mxu0 0.0
    %844 = vmatprep.subr.mxu0 0.0
    %845 = vmatpush1.msra.mxu0 0.0
    %846 = vmatprep.subr.mxu0 0.0
    %847 = vmatpush1.msra.mxu0 0.0
    %848 = vmatprep.subr.mxu0 0.0
    %849 = vmatpush1.msra.mxu0 0.0
    %850 = vmatprep.subr.mxu0 0.0
    %851 = vmatpush1.msra.mxu0 0.0
    %852 = vmatprep.subr.mxu0 0.0
    %853 = vmatpush1.msra.mxu0 0.0
    %854 = vmatprep.subr.mxu0 0.0
    %855 = vmatpush1.msra.mxu0 0.0
    %856 = vmatprep.subr.mxu0 0.0
    %857 = vmatpush1.msra.mxu0 0.0
    %858 = vmatprep.subr.mxu0 0.0
    %859 = vmatpush1.msra.mxu0 0.0
    %860 = vmatprep.subr.mxu0 0.0
    %861 = vmatpush1.msra.mxu0 0.0
    %862 = vmatprep.subr.mxu0 0.0
    %863 = vmatpush1.msra.mxu0 0.0
    %864 = vmatprep.subr.mxu0 0.0
    %865 = vmatpush1.msra.mxu0 0.0
    %866 = vmatprep.subr.mxu0 0.0
    %867 = vmatpush1.msra.mxu0 0.0
    %868 = vmatprep.subr.mxu0 0.0
    %869 = vmatpush1.msra.mxu0 0.0
    %870 = vmatprep.subr.mxu0 0.0
    %871 = vmatpush1.msra.mxu0 0.0
    %872 = vmatprep.subr.mxu0 0.0
    %873 = vmatpush1.msra.mxu0 0.0
    %874 = vmatprep.subr.mxu0 0.0
    %875 = vmatpush1.msra.mxu0 0.0
    %876 = vmatprep.subr.mxu0 0.0
    %877 = vmatpush1.msra.mxu0 0.0
    %878 = vmatprep.subr.mxu0 0.0
    %879 = vmatpush1.msra.mxu0 0.0
    %880 = vmatprep.subr.mxu0 0.0
    %881 = vmatpush1.msra.mxu0 0.0
    %882 = vmatprep.subr.mxu0 0.0
    %883 = vmatpush1.msra.mxu0 0.0
    %884 = vmatprep.subr.mxu0 0.0
    %885 = vmatpush1.msra.mxu0 0.0
    %886 = vmatprep.subr.mxu0 0.0
    %887 = vmatpush1.msra.mxu0 0.0
    %888 = vmatprep.subr.mxu0 0.0
    %889 = vmatpush1.msra.mxu0 0.0
    %890 = vmatprep.subr.mxu0 0.0
    %891 = vmatpush1.msra.mxu0 0.0
    %892 = vmatprep.subr.mxu0 0.0
    %893 = vmatpush1.msra.mxu0 0.0
    %894 = vmatprep.subr.mxu0 0.0
    %895 = vmatpush1.msra.mxu0 0.0
    %896 = vmatprep.subr.mxu0 0.0
    %897 = vmatpush1.msra.mxu0 0.0
    %898 = vmatprep.mubr.f32.mxu0 0.0
    %899 = vmatmul.mubr.f32.gmra.mrb[0].mxu0 %v832
    %v900 = vpop.f32.mrb[0].mxu0
    %v901 = vadd.f32 %v827, %v900
    %v902 = vpop.f32.mrb[0].mxu0
    %903 = vdwg.mxu0
    %v904 = vadd.f32 %v901, %v449
    %v905 = vtanh.pop %v904
    %906 = vst.msk [vmem:[#allocation2 + $0x2] sm:$0x1] %vm452, %v905
    %907 = vst.msk [vmem:[#allocation2 + $0x9] sm:$0x2] %vm454, %v905
    %908 = vmatprep.subr.mxu0 0.0
    %909 = vmatpush1.msra.mxu0 %v28
    %910 = vmatprep.subr.mxu0 0.0
    %911 = vmatpush1.msra.mxu0 0.0
    %912 = vmatprep.subr.mxu0 0.0
    %913 = vmatpush1.msra.mxu0 0.0
    %914 = vmatprep.subr.mxu0 0.0
    %915 = vmatpush1.msra.mxu0 0.0
    %916 = vmatprep.subr.mxu0 0.0
    %917 = vmatpush1.msra.mxu0 0.0
    %918 = vmatprep.subr.mxu0 0.0
    %919 = vmatpush1.msra.mxu0 0.0
    %920 = vmatprep.subr.mxu0 0.0
    %921 = vmatpush1.msra.mxu0 0.0
    %922 = vmatprep.subr.mxu0 0.0
    %923 = vmatpush1.msra.mxu0 0.0
    %924 = vmatprep.subr.mxu0 0.0
    %925 = vmatpush1.msra.mxu0 0.0
    %926 = vmatprep.subr.mxu0 0.0
    %927 = vmatpush1.msra.mxu0 0.0
    %928 = vmatprep.subr.mxu0 0.0
    %929 = vmatpush1.msra.mxu0 0.0
    %930 = vmatprep.subr.mxu0 0.0
    %931 = vmatpush1.msra.mxu0 0.0
    %932 = vmatprep.subr.mxu0 0.0
    %933 = vmatpush1.msra.mxu0 0.0
    %934 = vmatprep.subr.mxu0 0.0
    %935 = vmatpush1.msra.mxu0 0.0
    %936 = vmatprep.subr.mxu0 0.0
    %937 = vmatpush1.msra.mxu0 0.0
    %938 = vmatprep.subr.mxu0 0.0
    %939 = vmatpush1.msra.mxu0 0.0
    %940 = vmatprep.subr.mxu0 0.0
    %941 = vmatpush1.msra.mxu0 0.0
    %942 = vmatprep.subr.mxu0 0.0
    %943 = vmatpush1.msra.mxu0 0.0
    %944 = vmatprep.subr.mxu0 0.0
    %945 = vmatpush1.msra.mxu0 0.0
    %946 = vmatprep.subr.mxu0 0.0
    %947 = vmatpush1.msra.mxu0 0.0
    %948 = vmatprep.subr.mxu0 0.0
    %949 = vmatpush1.msra.mxu0 0.0
    %950 = vmatprep.subr.mxu0 0.0
    %951 = vmatpush1.msra.mxu0 0.0
    %952 = vmatprep.subr.mxu0 0.0
    %953 = vmatpush1.msra.mxu0 0.0
    %954 = vmatprep.subr.mxu0 0.0
    %955 = vmatpush1.msra.mxu0 0.0
    %956 = vmatprep.subr.mxu0 0.0
    %957 = vmatpush1.msra.mxu0 0.0
    %958 = vmatprep.subr.mxu0 0.0
    %959 = vmatpush1.msra.mxu0 0.0
    %960 = vmatprep.subr.mxu0 0.0
    %961 = vmatpush1.msra.mxu0 0.0
    %962 = vmatprep.subr.mxu0 0.0
    %963 = vmatpush1.msra.mxu0 0.0
    %964 = vmatprep.subr.mxu0 0.0
    %965 = vmatpush1.msra.mxu0 0.0
    %966 = vmatprep.subr.mxu0 0.0
    %967 = vmatpush1.msra.mxu0 0.0
    %968 = vmatprep.subr.mxu0 0.0
    %969 = vmatpush1.msra.mxu0 0.0
    %970 = vmatprep.subr.mxu0 0.0
    %971 = vmatpush1.msra.mxu0 0.0
    %972 = vmatprep.mubr.f32.mxu0 0.0
    %973 = vmatmul.mubr.f32.gmra.mrb[0].mxu0 %v832
    %v974 = vpop.f32.mrb[0].mxu0
    %v975 = vadd.f32 0.0, %v974
    %v976 = vpop.f32.mrb[0].mxu0
    %977 = vdwg.mxu0
    %v979 = vrot.slane %v975, 2
    %v981 = vadd.f32 %v219, %v979
    %v982 = vtanh.pop %v981
    %v984 = vsel %vm227, %v905, 0
    %986 = vmatprep.subr.mxu0 0.0
    %987 = vmatpush1.msra.mxu0 %v30
    %988 = vmatprep.subr.mxu0 0.0
    %989 = vmatpush1.msra.mxu0 0.0
    %990 = vmatprep.subr.mxu0 0.0
    %991 = vmatpush1.msra.mxu0 0.0
    %992 = vmatprep.subr.mxu0 0.0
    %993 = vmatpush1.msra.mxu0 0.0
    %994 = vmatprep.subr.mxu0 0.0
    %995 = vmatpush1.msra.mxu0 0.0
    %996 = vmatprep.subr.mxu0 0.0
    %997 = vmatpush1.msra.mxu0 0.0
    %998 = vmatprep.subr.mxu0 0.0
    %999 = vmatpush1.msra.mxu0 0.0
    %1000 = vmatprep.subr.mxu0 0.0
    %1001 = vmatpush1.msra.mxu0 0.0
    %1002 = vmatprep.subr.mxu0 0.0
    %1003 = vmatpush1.msra.mxu0 0.0
    %1004 = vmatprep.subr.mxu0 0.0
    %1005 = vmatpush1.msra.mxu0 0.0
    %1006 = vmatprep.subr.mxu0 0.0
    %1007 = vmatpush1.msra.mxu0 0.0
    %1008 = vmatprep.subr.mxu0 0.0
    %1009 = vmatpush1.msra.mxu0 0.0
    %1010 = vmatprep.subr.mxu0 0.0
    %1011 = vmatpush1.msra.mxu0 0.0
    %1012 = vmatprep.subr.mxu0 0.0
    %1013 = vmatpush1.msra.mxu0 0.0
    %1014 = vmatprep.subr.mxu0 0.0
    %1015 = vmatpush1.msra.mxu0 0.0
    %1016 = vmatprep.subr.mxu0 0.0
    %1017 = vmatpush1.msra.mxu0 0.0
    %1018 = vmatprep.subr.mxu0 0.0
    %1019 = vmatpush1.msra.mxu0 0.0
    %1020 = vmatprep.subr.mxu0 0.0
    %1021 = vmatpush1.msra.mxu0 0.0
    %1022 = vmatprep.subr.mxu0 0.0
    %1023 = vmatpush1.msra.mxu0 0.0
    %1024 = vmatprep.subr.mxu0 0.0
    %1025 = vmatpush1.msra.mxu0 0.0
    %1026 = vmatprep.subr.mxu0 0.0
    %1027 = vmatpush1.msra.mxu0 0.0
    %1028 = vmatprep.subr.mxu0 0.0
    %1029 = vmatpush1.msra.mxu0 0.0
    %1030 = vmatprep.subr.mxu0 0.0
    %1031 = vmatpush1.msra.mxu0 0.0
    %1032 = vmatprep.subr.mxu0 0.0
    %1033 = vmatpush1.msra.mxu0 0.0
    %1034 = vmatprep.subr.mxu0 0.0
    %1035 = vmatpush1.msra.mxu0 0.0
    %1036 = vmatprep.subr.mxu0 0.0
    %1037 = vmatpush1.msra.mxu0 0.0
    %1038 = vmatprep.subr.mxu0 0.0
    %1039 = vmatpush1.msra.mxu0 0.0
    %1040 = vmatprep.subr.mxu0 0.0
    %1041 = vmatpush1.msra.mxu0 0.0
    %1042 = vmatprep.subr.mxu0 0.0
    %1043 = vmatpush1.msra.mxu0 0.0
    %1044 = vmatprep.subr.mxu0 0.0
    %1045 = vmatpush1.msra.mxu0 0.0
    %1046 = vmatprep.subr.mxu0 0.0
    %1047 = vmatpush1.msra.mxu0 0.0
    %1048 = vmatprep.subr.mxu0 0.0
    %1049 = vmatpush1.msra.mxu0 0.0
    %1050 = vmatprep.mubr.f32.mxu0 0.0
    %1051 = vmatmul.mubr.f32.gmra.mrb[0].mxu0 %v984
    %v1052 = vpop.f32.mrb[0].mxu0
    %v1053 = vadd.f32 0.0, %v1052
    %v1054 = vpop.f32.mrb[0].mxu0
    %1055 = vdwg.mxu0
    %v1057 = vrot.slane %v982, 6
    %v1058 = vsel %vm227, %v1057, 0
    %1060 = vmatprep.subr.mxu0 0.0
    %1061 = vmatpush1.msra.mxu0 %v29
    %1062 = vmatprep.subr.mxu0 0.0
    %1063 = vmatpush1.msra.mxu0 0.0
    %1064 = vmatprep.subr.mxu0 0.0
    %1065 = vmatpush1.msra.mxu0 0.0
    %1066 = vmatprep.subr.mxu0 0.0
    %1067 = vmatpush1.msra.mxu0 0.0
    %1068 = vmatprep.subr.mxu0 0.0
    %1069 = vmatpush1.msra.mxu0 0.0
    %1070 = vmatprep.subr.mxu0 0.0
    %1071 = vmatpush1.msra.mxu0 0.0
    %1072 = vmatprep.subr.mxu0 0.0
    %1073 = vmatpush1.msra.mxu0 0.0
    %1074 = vmatprep.subr.mxu0 0.0
    %1075 = vmatpush1.msra.mxu0 0.0
    %1076 = vmatprep.subr.mxu0 0.0
    %1077 = vmatpush1.msra.mxu0 0.0
    %1078 = vmatprep.subr.mxu0 0.0
    %1079 = vmatpush1.msra.mxu0 0.0
    %1080 = vmatprep.subr.mxu0 0.0
    %1081 = vmatpush1.msra.mxu0 0.0
    %1082 = vmatprep.subr.mxu0 0.0
    %1083 = vmatpush1.msra.mxu0 0.0
    %1084 = vmatprep.subr.mxu0 0.0
    %1085 = vmatpush1.msra.mxu0 0.0
    %1086 = vmatprep.subr.mxu0 0.0
    %1087 = vmatpush1.msra.mxu0 0.0
    %1088 = vmatprep.subr.mxu0 0.0
    %1089 = vmatpush1.msra.mxu0 0.0
    %1090 = vmatprep.subr.mxu0 0.0
    %1091 = vmatpush1.msra.mxu0 0.0
    %1092 = vmatprep.subr.mxu0 0.0
    %1093 = vmatpush1.msra.mxu0 0.0
    %1094 = vmatprep.subr.mxu0 0.0
    %1095 = vmatpush1.msra.mxu0 0.0
    %1096 = vmatprep.subr.mxu0 0.0
    %1097 = vmatpush1.msra.mxu0 0.0
    %1098 = vmatprep.subr.mxu0 0.0
    %1099 = vmatpush1.msra.mxu0 0.0
    %1100 = vmatprep.subr.mxu0 0.0
    %1101 = vmatpush1.msra.mxu0 0.0
    %1102 = vmatprep.subr.mxu0 0.0
    %1103 = vmatpush1.msra.mxu0 0.0
    %1104 = vmatprep.subr.mxu0 0.0
    %1105 = vmatpush1.msra.mxu0 0.0
    %1106 = vmatprep.subr.mxu0 0.0
    %1107 = vmatpush1.msra.mxu0 0.0
    %1108 = vmatprep.subr.mxu0 0.0
    %1109 = vmatpush1.msra.mxu0 0.0
    %1110 = vmatprep.subr.mxu0 0.0
    %1111 = vmatpush1.msra.mxu0 0.0
    %1112 = vmatprep.subr.mxu0 0.0
    %1113 = vmatpush1.msra.mxu0 0.0
    %1114 = vmatprep.subr.mxu0 0.0
    %1115 = vmatpush1.msra.mxu0 0.0
    %1116 = vmatprep.subr.mxu0 0.0
    %1117 = vmatpush1.msra.mxu0 0.0
    %1118 = vmatprep.subr.mxu0 0.0
    %1119 = vmatpush1.msra.mxu0 0.0
    %1120 = vmatprep.subr.mxu0 0.0
    %1121 = vmatpush1.msra.mxu0 0.0
    %1122 = vmatprep.subr.mxu0 0.0
    %1123 = vmatpush1.msra.mxu0 0.0
    %1124 = vmatprep.mubr.f32.mxu0 0.0
    %1125 = vmatmul.mubr.f32.gmra.mrb[0].mxu0 %v1058
    %v1126 = vpop.f32.mrb[0].mxu0
    %v1127 = vadd.f32 %v1053, %v1126
    %v1128 = vpop.f32.mrb[0].mxu0
    %1129 = vdwg.mxu0
    %v1130 = vadd.f32 %v1127, %v449
    %v1131 = vtanh.pop %v1130
    %1132 = vst.msk [vmem:[#allocation2 + $0x3] sm:$0x1] %vm452, %v1131
    %1133 = vst.msk [vmem:[#allocation2 + $0xa] sm:$0x2] %vm454, %v1131
    %1134 = vmatprep.subr.mxu0 0.0
    %1135 = vmatpush1.msra.mxu0 %v28
    %1136 = vmatprep.subr.mxu0 0.0
    %1137 = vmatpush1.msra.mxu0 0.0
    %1138 = vmatprep.subr.mxu0 0.0
    %1139 = vmatpush1.msra.mxu0 0.0
    %1140 = vmatprep.subr.mxu0 0.0
    %1141 = vmatpush1.msra.mxu0 0.0
    %1142 = vmatprep.subr.mxu0 0.0
    %1143 = vmatpush1.msra.mxu0 0.0
    %1144 = vmatprep.subr.mxu0 0.0
    %1145 = vmatpush1.msra.mxu0 0.0
    %1146 = vmatprep.subr.mxu0 0.0
    %1147 = vmatpush1.msra.mxu0 0.0
    %1148 = vmatprep.subr.mxu0 0.0
    %1149 = vmatpush1.msra.mxu0 0.0
    %1150 = vmatprep.subr.mxu0 0.0
    %1151 = vmatpush1.msra.mxu0 0.0
    %1152 = vmatprep.subr.mxu0 0.0
    %1153 = vmatpush1.msra.mxu0 0.0
    %1154 = vmatprep.subr.mxu0 0.0
    %1155 = vmatpush1.msra.mxu0 0.0
    %1156 = vmatprep.subr.mxu0 0.0
    %1157 = vmatpush1.msra.mxu0 0.0
    %1158 = vmatprep.subr.mxu0 0.0
    %1159 = vmatpush1.msra.mxu0 0.0
    %1160 = vmatprep.subr.mxu0 0.0
    %1161 = vmatpush1.msra.mxu0 0.0
    %1162 = vmatprep.subr.mxu0 0.0
    %1163 = vmatpush1.msra.mxu0 0.0
    %1164 = vmatprep.subr.mxu0 0.0
    %1165 = vmatpush1.msra.mxu0 0.0
    %1166 = vmatprep.subr.mxu0 0.0
    %1167 = vmatpush1.msra.mxu0 0.0
    %1168 = vmatprep.subr.mxu0 0.0
    %1169 = vmatpush1.msra.mxu0 0.0
    %1170 = vmatprep.subr.mxu0 0.0
    %1171 = vmatpush1.msra.mxu0 0.0
    %1172 = vmatprep.subr.mxu0 0.0
    %1173 = vmatpush1.msra.mxu0 0.0
    %1174 = vmatprep.subr.mxu0 0.0
    %1175 = vmatpush1.msra.mxu0 0.0
    %1176 = vmatprep.subr.mxu0 0.0
    %1177 = vmatpush1.msra.mxu0 0.0
    %1178 = vmatprep.subr.mxu0 0.0
    %1179 = vmatpush1.msra.mxu0 0.0
    %1180 = vmatprep.subr.mxu0 0.0
    %1181 = vmatpush1.msra.mxu0 0.0
    %1182 = vmatprep.subr.mxu0 0.0
    %1183 = vmatpush1.msra.mxu0 0.0
    %1184 = vmatprep.subr.mxu0 0.0
    %1185 = vmatpush1.msra.mxu0 0.0
    %1186 = vmatprep.subr.mxu0 0.0
    %1187 = vmatpush1.msra.mxu0 0.0
    %1188 = vmatprep.subr.mxu0 0.0
    %1189 = vmatpush1.msra.mxu0 0.0
    %1190 = vmatprep.subr.mxu0 0.0
    %1191 = vmatpush1.msra.mxu0 0.0
    %1192 = vmatprep.subr.mxu0 0.0
    %1193 = vmatpush1.msra.mxu0 0.0
    %1194 = vmatprep.subr.mxu0 0.0
    %1195 = vmatpush1.msra.mxu0 0.0
    %1196 = vmatprep.subr.mxu0 0.0
    %1197 = vmatpush1.msra.mxu0 0.0
    %1198 = vmatprep.mubr.f32.mxu0 0.0
    %1199 = vmatmul.mubr.f32.gmra.mrb[0].mxu0 %v1058
    %v1200 = vpop.f32.mrb[0].mxu0
    %v1201 = vadd.f32 0.0, %v1200
    %v1202 = vpop.f32.mrb[0].mxu0
    %1203 = vdwg.mxu0
    %v1204 = vadd.f32 %v224, %v1201
    %v1205 = vtanh.pop %v1204
    %v1207 = vsel %vm227, %v1131, 0
    %1209 = vmatprep.subr.mxu0 0.0
    %1210 = vmatpush1.msra.mxu0 %v30
    %1211 = vmatprep.subr.mxu0 0.0
    %1212 = vmatpush1.msra.mxu0 0.0
    %1213 = vmatprep.subr.mxu0 0.0
    %1214 = vmatpush1.msra.mxu0 0.0
    %1215 = vmatprep.subr.mxu0 0.0
    %1216 = vmatpush1.msra.mxu0 0.0
    %1217 = vmatprep.subr.mxu0 0.0
    %1218 = vmatpush1.msra.mxu0 0.0
    %1219 = vmatprep.subr.mxu0 0.0
    %1220 = vmatpush1.msra.mxu0 0.0
    %1221 = vmatprep.subr.mxu0 0.0
    %1222 = vmatpush1.msra.mxu0 0.0
    %1223 = vmatprep.subr.mxu0 0.0
    %1224 = vmatpush1.msra.mxu0 0.0
    %1225 = vmatprep.subr.mxu0 0.0
    %1226 = vmatpush1.msra.mxu0 0.0
    %1227 = vmatprep.subr.mxu0 0.0
    %1228 = vmatpush1.msra.mxu0 0.0
    %1229 = vmatprep.subr.mxu0 0.0
    %1230 = vmatpush1.msra.mxu0 0.0
    %1231 = vmatprep.subr.mxu0 0.0
    %1232 = vmatpush1.msra.mxu0 0.0
    %1233 = vmatprep.subr.mxu0 0.0
    %1234 = vmatpush1.msra.mxu0 0.0
    %1235 = vmatprep.subr.mxu0 0.0
    %1236 = vmatpush1.msra.mxu0 0.0
    %1237 = vmatprep.subr.mxu0 0.0
    %1238 = vmatpush1.msra.mxu0 0.0
    %1239 = vmatprep.subr.mxu0 0.0
    %1240 = vmatpush1.msra.mxu0 0.0
    %1241 = vmatprep.subr.mxu0 0.0
    %1242 = vmatpush1.msra.mxu0 0.0
    %1243 = vmatprep.subr.mxu0 0.0
    %1244 = vmatpush1.msra.mxu0 0.0
    %1245 = vmatprep.subr.mxu0 0.0
    %1246 = vmatpush1.msra.mxu0 0.0
    %1247 = vmatprep.subr.mxu0 0.0
    %1248 = vmatpush1.msra.mxu0 0.0
    %1249 = vmatprep.subr.mxu0 0.0
    %1250 = vmatpush1.msra.mxu0 0.0
    %1251 = vmatprep.subr.mxu0 0.0
    %1252 = vmatpush1.msra.mxu0 0.0
    %1253 = vmatprep.subr.mxu0 0.0
    %1254 = vmatpush1.msra.mxu0 0.0
    %1255 = vmatprep.subr.mxu0 0.0
    %1256 = vmatpush1.msra.mxu0 0.0
    %1257 = vmatprep.subr.mxu0 0.0
    %1258 = vmatpush1.msra.mxu0 0.0
    %1259 = vmatprep.subr.mxu0 0.0
    %1260 = vmatpush1.msra.mxu0 0.0
    %1261 = vmatprep.subr.mxu0 0.0
    %1262 = vmatpush1.msra.mxu0 0.0
    %1263 = vmatprep.subr.mxu0 0.0
    %1264 = vmatpush1.msra.mxu0 0.0
    %1265 = vmatprep.subr.mxu0 0.0
    %1266 = vmatpush1.msra.mxu0 0.0
    %1267 = vmatprep.subr.mxu0 0.0
    %1268 = vmatpush1.msra.mxu0 0.0
    %1269 = vmatprep.subr.mxu0 0.0
    %1270 = vmatpush1.msra.mxu0 0.0
    %1271 = vmatprep.subr.mxu0 0.0
    %1272 = vmatpush1.msra.mxu0 0.0
    %1273 = vmatprep.mubr.f32.mxu0 0.0
    %1274 = vmatmul.mubr.f32.gmra.mrb[0].mxu0 %v1207
    %v1275 = vpop.f32.mrb[0].mxu0
    %v1276 = vadd.f32 0.0, %v1275
    %v1277 = vpop.f32.mrb[0].mxu0
    %1278 = vdwg.mxu0
    %v1280 = vsel %vm227, %v1205, 0
    %1282 = vmatprep.subr.mxu0 0.0
    %1283 = vmatpush1.msra.mxu0 %v29
    %1284 = vmatprep.subr.mxu0 0.0
    %1285 = vmatpush1.msra.mxu0 0.0
    %1286 = vmatprep.subr.mxu0 0.0
    %1287 = vmatpush1.msra.mxu0 0.0
    %1288 = vmatprep.subr.mxu0 0.0
    %1289 = vmatpush1.msra.mxu0 0.0
    %1290 = vmatprep.subr.mxu0 0.0
    %1291 = vmatpush1.msra.mxu0 0.0
    %1292 = vmatprep.subr.mxu0 0.0
    %1293 = vmatpush1.msra.mxu0 0.0
    %1294 = vmatprep.subr.mxu0 0.0
    %1295 = vmatpush1.msra.mxu0 0.0
    %1296 = vmatprep.subr.mxu0 0.0
    %1297 = vmatpush1.msra.mxu0 0.0
    %1298 = vmatprep.subr.mxu0 0.0
    %1299 = vmatpush1.msra.mxu0 0.0
    %1300 = vmatprep.subr.mxu0 0.0
    %1301 = vmatpush1.msra.mxu0 0.0
    %1302 = vmatprep.subr.mxu0 0.0
    %1303 = vmatpush1.msra.mxu0 0.0
    %1304 = vmatprep.subr.mxu0 0.0
    %1305 = vmatpush1.msra.mxu0 0.0
    %1306 = vmatprep.subr.mxu0 0.0
    %1307 = vmatpush1.msra.mxu0 0.0
    %1308 = vmatprep.subr.mxu0 0.0
    %1309 = vmatpush1.msra.mxu0 0.0
    %1310 = vmatprep.subr.mxu0 0.0
    %1311 = vmatpush1.msra.mxu0 0.0
    %1312 = vmatprep.subr.mxu0 0.0
    %1313 = vmatpush1.msra.mxu0 0.0
    %1314 = vmatprep.subr.mxu0 0.0
    %1315 = vmatpush1.msra.mxu0 0.0
    %1316 = vmatprep.subr.mxu0 0.0
    %1317 = vmatpush1.msra.mxu0 0.0
    %1318 = vmatprep.subr.mxu0 0.0
    %1319 = vmatpush1.msra.mxu0 0.0
    %1320 = vmatprep.subr.mxu0 0.0
    %1321 = vmatpush1.msra.mxu0 0.0
    %1322 = vmatprep.subr.mxu0 0.0
    %1323 = vmatpush1.msra.mxu0 0.0
    %1324 = vmatprep.subr.mxu0 0.0
    %1325 = vmatpush1.msra.mxu0 0.0
    %1326 = vmatprep.subr.mxu0 0.0
    %1327 = vmatpush1.msra.mxu0 0.0
    %1328 = vmatprep.subr.mxu0 0.0
    %1329 = vmatpush1.msra.mxu0 0.0
    %1330 = vmatprep.subr.mxu0 0.0
    %1331 = vmatpush1.msra.mxu0 0.0
    %1332 = vmatprep.subr.mxu0 0.0
    %1333 = vmatpush1.msra.mxu0 0.0
    %1334 = vmatprep.subr.mxu0 0.0
    %1335 = vmatpush1.msra.mxu0 0.0
    %1336 = vmatprep.subr.mxu0 0.0
    %1337 = vmatpush1.msra.mxu0 0.0
    %1338 = vmatprep.subr.mxu0 0.0
    %1339 = vmatpush1.msra.mxu0 0.0
    %1340 = vmatprep.subr.mxu0 0.0
    %1341 = vmatpush1.msra.mxu0 0.0
    %1342 = vmatprep.subr.mxu0 0.0
    %1343 = vmatpush1.msra.mxu0 0.0
    %1344 = vmatprep.subr.mxu0 0.0
    %1345 = vmatpush1.msra.mxu0 0.0
    %1346 = vmatprep.mubr.f32.mxu0 0.0
    %1347 = vmatmul.mubr.f32.gmra.mrb[0].mxu0 %v1280
    %v1348 = vpop.f32.mrb[0].mxu0
    %v1349 = vadd.f32 %v1276, %v1348
    %v1350 = vpop.f32.mrb[0].mxu0
    %1351 = vdwg.mxu0
    %v1352 = vadd.f32 %v1349, %v449
    %v1353 = vtanh.pop %v1352
    %1354 = vst.msk [vmem:[#allocation2 + $0x4] sm:$0x1] %vm452, %v1353
    %1355 = vst.msk [vmem:[#allocation2 + $0xb] sm:$0x2] %vm454, %v1353
    %1356 = vmatprep.subr.mxu0 0.0
    %1357 = vmatpush1.msra.mxu0 %v28
    %1358 = vmatprep.subr.mxu0 0.0
    %1359 = vmatpush1.msra.mxu0 0.0
    %1360 = vmatprep.subr.mxu0 0.0
    %1361 = vmatpush1.msra.mxu0 0.0
    %1362 = vmatprep.subr.mxu0 0.0
    %1363 = vmatpush1.msra.mxu0 0.0
    %1364 = vmatprep.subr.mxu0 0.0
    %1365 = vmatpush1.msra.mxu0 0.0
    %1366 = vmatprep.subr.mxu0 0.0
    %1367 = vmatpush1.msra.mxu0 0.0
    %1368 = vmatprep.subr.mxu0 0.0
    %1369 = vmatpush1.msra.mxu0 0.0
    %1370 = vmatprep.subr.mxu0 0.0
    %1371 = vmatpush1.msra.mxu0 0.0
    %1372 = vmatprep.subr.mxu0 0.0
    %1373 = vmatpush1.msra.mxu0 0.0
    %1374 = vmatprep.subr.mxu0 0.0
    %1375 = vmatpush1.msra.mxu0 0.0
    %1376 = vmatprep.subr.mxu0 0.0
    %1377 = vmatpush1.msra.mxu0 0.0
    %1378 = vmatprep.subr.mxu0 0.0
    %1379 = vmatpush1.msra.mxu0 0.0
    %1380 = vmatprep.subr.mxu0 0.0
    %1381 = vmatpush1.msra.mxu0 0.0
    %1382 = vmatprep.subr.mxu0 0.0
    %1383 = vmatpush1.msra.mxu0 0.0
    %1384 = vmatprep.subr.mxu0 0.0
    %1385 = vmatpush1.msra.mxu0 0.0
    %1386 = vmatprep.subr.mxu0 0.0
    %1387 = vmatpush1.msra.mxu0 0.0
    %1388 = vmatprep.subr.mxu0 0.0
    %1389 = vmatpush1.msra.mxu0 0.0
    %1390 = vmatprep.subr.mxu0 0.0
    %1391 = vmatpush1.msra.mxu0 0.0
    %1392 = vmatprep.subr.mxu0 0.0
    %1393 = vmatpush1.msra.mxu0 0.0
    %1394 = vmatprep.subr.mxu0 0.0
    %1395 = vmatpush1.msra.mxu0 0.0
    %1396 = vmatprep.subr.mxu0 0.0
    %1397 = vmatpush1.msra.mxu0 0.0
    %1398 = vmatprep.subr.mxu0 0.0
    %1399 = vmatpush1.msra.mxu0 0.0
    %1400 = vmatprep.subr.mxu0 0.0
    %1401 = vmatpush1.msra.mxu0 0.0
    %1402 = vmatprep.subr.mxu0 0.0
    %1403 = vmatpush1.msra.mxu0 0.0
    %1404 = vmatprep.subr.mxu0 0.0
    %1405 = vmatpush1.msra.mxu0 0.0
    %1406 = vmatprep.subr.mxu0 0.0
    %1407 = vmatpush1.msra.mxu0 0.0
    %1408 = vmatprep.subr.mxu0 0.0
    %1409 = vmatpush1.msra.mxu0 0.0
    %1410 = vmatprep.subr.mxu0 0.0
    %1411 = vmatpush1.msra.mxu0 0.0
    %1412 = vmatprep.subr.mxu0 0.0
    %1413 = vmatpush1.msra.mxu0 0.0
    %1414 = vmatprep.subr.mxu0 0.0
    %1415 = vmatpush1.msra.mxu0 0.0
    %1416 = vmatprep.subr.mxu0 0.0
    %1417 = vmatpush1.msra.mxu0 0.0
    %1418 = vmatprep.subr.mxu0 0.0
    %1419 = vmatpush1.msra.mxu0 0.0
    %1420 = vmatprep.mubr.f32.mxu0 0.0
    %1421 = vmatmul.mubr.f32.gmra.mrb[0].mxu0 %v1280
    %v1422 = vpop.f32.mrb[0].mxu0
    %v1423 = vadd.f32 0.0, %v1422
    %v1424 = vpop.f32.mrb[0].mxu0
    %1425 = vdwg.mxu0
    %v1427 = vrot.slane %v1423, 6
    %v1429 = vadd.f32 %v224, %v1427
    %v1430 = vtanh.pop %v1429
    %v1432 = vsel %vm227, %v1353, 0
    %1434 = vmatprep.subr.mxu0 0.0
    %1435 = vmatpush1.msra.mxu0 %v30
    %1436 = vmatprep.subr.mxu0 0.0
    %1437 = vmatpush1.msra.mxu0 0.0
    %1438 = vmatprep.subr.mxu0 0.0
    %1439 = vmatpush1.msra.mxu0 0.0
    %1440 = vmatprep.subr.mxu0 0.0
    %1441 = vmatpush1.msra.mxu0 0.0
    %1442 = vmatprep.subr.mxu0 0.0
    %1443 = vmatpush1.msra.mxu0 0.0
    %1444 = vmatprep.subr.mxu0 0.0
    %1445 = vmatpush1.msra.mxu0 0.0
    %1446 = vmatprep.subr.mxu0 0.0
    %1447 = vmatpush1.msra.mxu0 0.0
    %1448 = vmatprep.subr.mxu0 0.0
    %1449 = vmatpush1.msra.mxu0 0.0
    %1450 = vmatprep.subr.mxu0 0.0
    %1451 = vmatpush1.msra.mxu0 0.0
    %1452 = vmatprep.subr.mxu0 0.0
    %1453 = vmatpush1.msra.mxu0 0.0
    %1454 = vmatprep.subr.mxu0 0.0
    %1455 = vmatpush1.msra.mxu0 0.0
    %1456 = vmatprep.subr.mxu0 0.0
    %1457 = vmatpush1.msra.mxu0 0.0
    %1458 = vmatprep.subr.mxu0 0.0
    %1459 = vmatpush1.msra.mxu0 0.0
    %1460 = vmatprep.subr.mxu0 0.0
    %1461 = vmatpush1.msra.mxu0 0.0
    %1462 = vmatprep.subr.mxu0 0.0
    %1463 = vmatpush1.msra.mxu0 0.0
    %1464 = vmatprep.subr.mxu0 0.0
    %1465 = vmatpush1.msra.mxu0 0.0
    %1466 = vmatprep.subr.mxu0 0.0
    %1467 = vmatpush1.msra.mxu0 0.0
    %1468 = vmatprep.subr.mxu0 0.0
    %1469 = vmatpush1.msra.mxu0 0.0
    %1470 = vmatprep.subr.mxu0 0.0
    %1471 = vmatpush1.msra.mxu0 0.0
    %1472 = vmatprep.subr.mxu0 0.0
    %1473 = vmatpush1.msra.mxu0 0.0
    %1474 = vmatprep.subr.mxu0 0.0
    %1475 = vmatpush1.msra.mxu0 0.0
    %1476 = vmatprep.subr.mxu0 0.0
    %1477 = vmatpush1.msra.mxu0 0.0
    %1478 = vmatprep.subr.mxu0 0.0
    %1479 = vmatpush1.msra.mxu0 0.0
    %1480 = vmatprep.subr.mxu0 0.0
    %1481 = vmatpush1.msra.mxu0 0.0
    %1482 = vmatprep.subr.mxu0 0.0
    %1483 = vmatpush1.msra.mxu0 0.0
    %1484 = vmatprep.subr.mxu0 0.0
    %1485 = vmatpush1.msra.mxu0 0.0
    %1486 = vmatprep.subr.mxu0 0.0
    %1487 = vmatpush1.msra.mxu0 0.0
    %1488 = vmatprep.subr.mxu0 0.0
    %1489 = vmatpush1.msra.mxu0 0.0
    %1490 = vmatprep.subr.mxu0 0.0
    %1491 = vmatpush1.msra.mxu0 0.0
    %1492 = vmatprep.subr.mxu0 0.0
    %1493 = vmatpush1.msra.mxu0 0.0
    %1494 = vmatprep.subr.mxu0 0.0
    %1495 = vmatpush1.msra.mxu0 0.0
    %1496 = vmatprep.subr.mxu0 0.0
    %1497 = vmatpush1.msra.mxu0 0.0
    %1498 = vmatprep.mubr.f32.mxu0 0.0
    %1499 = vmatmul.mubr.f32.gmra.mrb[0].mxu0 %v1432
    %v1500 = vpop.f32.mrb[0].mxu0
    %v1501 = vadd.f32 0.0, %v1500
    %v1502 = vpop.f32.mrb[0].mxu0
    %1503 = vdwg.mxu0
    %v1505 = vrot.slane %v1430, 2
    %v1506 = vsel %vm227, %v1505, 0
    %1508 = vmatprep.subr.mxu0 0.0
    %1509 = vmatpush1.msra.mxu0 %v29
    %1510 = vmatprep.subr.mxu0 0.0
    %1511 = vmatpush1.msra.mxu0 0.0
    %1512 = vmatprep.subr.mxu0 0.0
    %1513 = vmatpush1.msra.mxu0 0.0
    %1514 = vmatprep.subr.mxu0 0.0
    %1515 = vmatpush1.msra.mxu0 0.0
    %1516 = vmatprep.subr.mxu0 0.0
    %1517 = vmatpush1.msra.mxu0 0.0
    %1518 = vmatprep.subr.mxu0 0.0
    %1519 = vmatpush1.msra.mxu0 0.0
    %1520 = vmatprep.subr.mxu0 0.0
    %1521 = vmatpush1.msra.mxu0 0.0
    %1522 = vmatprep.subr.mxu0 0.0
    %1523 = vmatpush1.msra.mxu0 0.0
    %1524 = vmatprep.subr.mxu0 0.0
    %1525 = vmatpush1.msra.mxu0 0.0
    %1526 = vmatprep.subr.mxu0 0.0
    %1527 = vmatpush1.msra.mxu0 0.0
    %1528 = vmatprep.subr.mxu0 0.0
    %1529 = vmatpush1.msra.mxu0 0.0
    %1530 = vmatprep.subr.mxu0 0.0
    %1531 = vmatpush1.msra.mxu0 0.0
    %1532 = vmatprep.subr.mxu0 0.0
    %1533 = vmatpush1.msra.mxu0 0.0
    %1534 = vmatprep.subr.mxu0 0.0
    %1535 = vmatpush1.msra.mxu0 0.0
    %1536 = vmatprep.subr.mxu0 0.0
    %1537 = vmatpush1.msra.mxu0 0.0
    %1538 = vmatprep.subr.mxu0 0.0
    %1539 = vmatpush1.msra.mxu0 0.0
    %1540 = vmatprep.subr.mxu0 0.0
    %1541 = vmatpush1.msra.mxu0 0.0
    %1542 = vmatprep.subr.mxu0 0.0
    %1543 = vmatpush1.msra.mxu0 0.0
    %1544 = vmatprep.subr.mxu0 0.0
    %1545 = vmatpush1.msra.mxu0 0.0
    %1546 = vmatprep.subr.mxu0 0.0
    %1547 = vmatpush1.msra.mxu0 0.0
    %1548 = vmatprep.subr.mxu0 0.0
    %1549 = vmatpush1.msra.mxu0 0.0
    %1550 = vmatprep.subr.mxu0 0.0
    %1551 = vmatpush1.msra.mxu0 0.0
    %1552 = vmatprep.subr.mxu0 0.0
    %1553 = vmatpush1.msra.mxu0 0.0
    %1554 = vmatprep.subr.mxu0 0.0
    %1555 = vmatpush1.msra.mxu0 0.0
    %1556 = vmatprep.subr.mxu0 0.0
    %1557 = vmatpush1.msra.mxu0 0.0
    %1558 = vmatprep.subr.mxu0 0.0
    %1559 = vmatpush1.msra.mxu0 0.0
    %1560 = vmatprep.subr.mxu0 0.0
    %1561 = vmatpush1.msra.mxu0 0.0
    %1562 = vmatprep.subr.mxu0 0.0
    %1563 = vmatpush1.msra.mxu0 0.0
    %1564 = vmatprep.subr.mxu0 0.0
    %1565 = vmatpush1.msra.mxu0 0.0
    %1566 = vmatprep.subr.mxu0 0.0
    %1567 = vmatpush1.msra.mxu0 0.0
    %1568 = vmatprep.subr.mxu0 0.0
    %1569 = vmatpush1.msra.mxu0 0.0
    %1570 = vmatprep.subr.mxu0 0.0
    %1571 = vmatpush1.msra.mxu0 0.0
    %1572 = vmatprep.mubr.f32.mxu0 0.0
    %1573 = vmatmul.mubr.f32.gmra.mrb[0].mxu0 %v1506
    %v1574 = vpop.f32.mrb[0].mxu0
    %v1575 = vadd.f32 %v1501, %v1574
    %v1576 = vpop.f32.mrb[0].mxu0
    %1577 = vdwg.mxu0
    %v1578 = vadd.f32 %v1575, %v449
    %v1579 = vtanh.pop %v1578
    %1580 = vst.msk [vmem:[#allocation2 + $0x5] sm:$0x1] %vm452, %v1579
    %1581 = vst.msk [vmem:[#allocation2 + $0xc] sm:$0x2] %vm454, %v1579
    %1582 = vmatprep.subr.mxu0 0.0
    %1583 = vmatpush1.msra.mxu0 %v28
    %1584 = vmatprep.subr.mxu0 0.0
    %1585 = vmatpush1.msra.mxu0 0.0
    %1586 = vmatprep.subr.mxu0 0.0
    %1587 = vmatpush1.msra.mxu0 0.0
    %1588 = vmatprep.subr.mxu0 0.0
    %1589 = vmatpush1.msra.mxu0 0.0
    %1590 = vmatprep.subr.mxu0 0.0
    %1591 = vmatpush1.msra.mxu0 0.0
    %1592 = vmatprep.subr.mxu0 0.0
    %1593 = vmatpush1.msra.mxu0 0.0
    %1594 = vmatprep.subr.mxu0 0.0
    %1595 = vmatpush1.msra.mxu0 0.0
    %1596 = vmatprep.subr.mxu0 0.0
    %1597 = vmatpush1.msra.mxu0 0.0
    %1598 = vmatprep.subr.mxu0 0.0
    %1599 = vmatpush1.msra.mxu0 0.0
    %1600 = vmatprep.subr.mxu0 0.0
    %1601 = vmatpush1.msra.mxu0 0.0
    %1602 = vmatprep.subr.mxu0 0.0
    %1603 = vmatpush1.msra.mxu0 0.0
    %1604 = vmatprep.subr.mxu0 0.0
    %1605 = vmatpush1.msra.mxu0 0.0
    %1606 = vmatprep.subr.mxu0 0.0
    %1607 = vmatpush1.msra.mxu0 0.0
    %1608 = vmatprep.subr.mxu0 0.0
    %1609 = vmatpush1.msra.mxu0 0.0
    %1610 = vmatprep.subr.mxu0 0.0
    %1611 = vmatpush1.msra.mxu0 0.0
    %1612 = vmatprep.subr.mxu0 0.0
    %1613 = vmatpush1.msra.mxu0 0.0
    %1614 = vmatprep.subr.mxu0 0.0
    %1615 = vmatpush1.msra.mxu0 0.0
    %1616 = vmatprep.subr.mxu0 0.0
    %1617 = vmatpush1.msra.mxu0 0.0
    %1618 = vmatprep.subr.mxu0 0.0
    %1619 = vmatpush1.msra.mxu0 0.0
    %1620 = vmatprep.subr.mxu0 0.0
    %1621 = vmatpush1.msra.mxu0 0.0
    %1622 = vmatprep.subr.mxu0 0.0
    %1623 = vmatpush1.msra.mxu0 0.0
    %1624 = vmatprep.subr.mxu0 0.0
    %1625 = vmatpush1.msra.mxu0 0.0
    %1626 = vmatprep.subr.mxu0 0.0
    %1627 = vmatpush1.msra.mxu0 0.0
    %1628 = vmatprep.subr.mxu0 0.0
    %1629 = vmatpush1.msra.mxu0 0.0
    %1630 = vmatprep.subr.mxu0 0.0
    %1631 = vmatpush1.msra.mxu0 0.0
    %1632 = vmatprep.subr.mxu0 0.0
    %1633 = vmatpush1.msra.mxu0 0.0
    %1634 = vmatprep.subr.mxu0 0.0
    %1635 = vmatpush1.msra.mxu0 0.0
    %1636 = vmatprep.subr.mxu0 0.0
    %1637 = vmatpush1.msra.mxu0 0.0
    %1638 = vmatprep.subr.mxu0 0.0
    %1639 = vmatpush1.msra.mxu0 0.0
    %1640 = vmatprep.subr.mxu0 0.0
    %1641 = vmatpush1.msra.mxu0 0.0
    %1642 = vmatprep.subr.mxu0 0.0
    %1643 = vmatpush1.msra.mxu0 0.0
    %1644 = vmatprep.subr.mxu0 0.0
    %1645 = vmatpush1.msra.mxu0 0.0
    %1646 = vmatprep.mubr.f32.mxu0 0.0
    %1647 = vmatmul.mubr.f32.gmra.mrb[0].mxu0 %v1506
    %v1648 = vpop.f32.mrb[0].mxu0
    %v1649 = vadd.f32 0.0, %v1648
    %v1650 = vpop.f32.mrb[0].mxu0
    %1651 = vdwg.mxu0
    %v1653 = vrot.slane %v1649, 4
    %v1655 = vadd.f32 %v224, %v1653
    %v1656 = vtanh.pop %v1655
    %v1658 = vsel %vm227, %v1579, 0
    %1660 = vmatprep.subr.mxu0 0.0
    %1661 = vmatpush1.msra.mxu0 %v30
    %1662 = vmatprep.subr.mxu0 0.0
    %1663 = vmatpush1.msra.mxu0 0.0
    %1664 = vmatprep.subr.mxu0 0.0
    %1665 = vmatpush1.msra.mxu0 0.0
    %1666 = vmatprep.subr.mxu0 0.0
    %1667 = vmatpush1.msra.mxu0 0.0
    %1668 = vmatprep.subr.mxu0 0.0
    %1669 = vmatpush1.msra.mxu0 0.0
    %1670 = vmatprep.subr.mxu0 0.0
    %1671 = vmatpush1.msra.mxu0 0.0
    %1672 = vmatprep.subr.mxu0 0.0
    %1673 = vmatpush1.msra.mxu0 0.0
    %1674 = vmatprep.subr.mxu0 0.0
    %1675 = vmatpush1.msra.mxu0 0.0
    %1676 = vmatprep.subr.mxu0 0.0
    %1677 = vmatpush1.msra.mxu0 0.0
    %1678 = vmatprep.subr.mxu0 0.0
    %1679 = vmatpush1.msra.mxu0 0.0
    %1680 = vmatprep.subr.mxu0 0.0
    %1681 = vmatpush1.msra.mxu0 0.0
    %1682 = vmatprep.subr.mxu0 0.0
    %1683 = vmatpush1.msra.mxu0 0.0
    %1684 = vmatprep.subr.mxu0 0.0
    %1685 = vmatpush1.msra.mxu0 0.0
    %1686 = vmatprep.subr.mxu0 0.0
    %1687 = vmatpush1.msra.mxu0 0.0
    %1688 = vmatprep.subr.mxu0 0.0
    %1689 = vmatpush1.msra.mxu0 0.0
    %1690 = vmatprep.subr.mxu0 0.0
    %1691 = vmatpush1.msra.mxu0 0.0
    %1692 = vmatprep.subr.mxu0 0.0
    %1693 = vmatpush1.msra.mxu0 0.0
    %1694 = vmatprep.subr.mxu0 0.0
    %1695 = vmatpush1.msra.mxu0 0.0
    %1696 = vmatprep.subr.mxu0 0.0
    %1697 = vmatpush1.msra.mxu0 0.0
    %1698 = vmatprep.subr.mxu0 0.0
    %1699 = vmatpush1.msra.mxu0 0.0
    %1700 = vmatprep.subr.mxu0 0.0
    %1701 = vmatpush1.msra.mxu0 0.0
    %1702 = vmatprep.subr.mxu0 0.0
    %1703 = vmatpush1.msra.mxu0 0.0
    %1704 = vmatprep.subr.mxu0 0.0
    %1705 = vmatpush1.msra.mxu0 0.0
    %1706 = vmatprep.subr.mxu0 0.0
    %1707 = vmatpush1.msra.mxu0 0.0
    %1708 = vmatprep.subr.mxu0 0.0
    %1709 = vmatpush1.msra.mxu0 0.0
    %1710 = vmatprep.subr.mxu0 0.0
    %1711 = vmatpush1.msra.mxu0 0.0
    %1712 = vmatprep.subr.mxu0 0.0
    %1713 = vmatpush1.msra.mxu0 0.0
    %1714 = vmatprep.subr.mxu0 0.0
    %1715 = vmatpush1.msra.mxu0 0.0
    %1716 = vmatprep.subr.mxu0 0.0
    %1717 = vmatpush1.msra.mxu0 0.0
    %1718 = vmatprep.subr.mxu0 0.0
    %1719 = vmatpush1.msra.mxu0 0.0
    %1720 = vmatprep.subr.mxu0 0.0
    %1721 = vmatpush1.msra.mxu0 0.0
    %1722 = vmatprep.subr.mxu0 0.0
    %1723 = vmatpush1.msra.mxu0 0.0
    %1724 = vmatprep.mubr.f32.mxu0 0.0
    %1725 = vmatmul.mubr.f32.gmra.mrb[0].mxu0 %v1658
    %v1726 = vpop.f32.mrb[0].mxu0
    %v1727 = vadd.f32 0.0, %v1726
    %v1728 = vpop.f32.mrb[0].mxu0
    %1729 = vdwg.mxu0
    %v1731 = vrot.slane %v1656, 4
    %v1732 = vsel %vm227, %v1731, 0
    %1734 = vmatprep.subr.mxu0 0.0
    %1735 = vmatpush1.msra.mxu0 %v29
    %1736 = vmatprep.subr.mxu0 0.0
    %1737 = vmatpush1.msra.mxu0 0.0
    %1738 = vmatprep.subr.mxu0 0.0
    %1739 = vmatpush1.msra.mxu0 0.0
    %1740 = vmatprep.subr.mxu0 0.0
    %1741 = vmatpush1.msra.mxu0 0.0
    %1742 = vmatprep.subr.mxu0 0.0
    %1743 = vmatpush1.msra.mxu0 0.0
    %1744 = vmatprep.subr.mxu0 0.0
    %1745 = vmatpush1.msra.mxu0 0.0
    %1746 = vmatprep.subr.mxu0 0.0
    %1747 = vmatpush1.msra.mxu0 0.0
    %1748 = vmatprep.subr.mxu0 0.0
    %1749 = vmatpush1.msra.mxu0 0.0
    %1750 = vmatprep.subr.mxu0 0.0
    %1751 = vmatpush1.msra.mxu0 0.0
    %1752 = vmatprep.subr.mxu0 0.0
    %1753 = vmatpush1.msra.mxu0 0.0
    %1754 = vmatprep.subr.mxu0 0.0
    %1755 = vmatpush1.msra.mxu0 0.0
    %1756 = vmatprep.subr.mxu0 0.0
    %1757 = vmatpush1.msra.mxu0 0.0
    %1758 = vmatprep.subr.mxu0 0.0
    %1759 = vmatpush1.msra.mxu0 0.0
    %1760 = vmatprep.subr.mxu0 0.0
    %1761 = vmatpush1.msra.mxu0 0.0
    %1762 = vmatprep.subr.mxu0 0.0
    %1763 = vmatpush1.msra.mxu0 0.0
    %1764 = vmatprep.subr.mxu0 0.0
    %1765 = vmatpush1.msra.mxu0 0.0
    %1766 = vmatprep.subr.mxu0 0.0
    %1767 = vmatpush1.msra.mxu0 0.0
    %1768 = vmatprep.subr.mxu0 0.0
    %1769 = vmatpush1.msra.mxu0 0.0
    %1770 = vmatprep.subr.mxu0 0.0
    %1771 = vmatpush1.msra.mxu0 0.0
    %1772 = vmatprep.subr.mxu0 0.0
    %1773 = vmatpush1.msra.mxu0 0.0
    %1774 = vmatprep.subr.mxu0 0.0
    %1775 = vmatpush1.msra.mxu0 0.0
    %1776 = vmatprep.subr.mxu0 0.0
    %1777 = vmatpush1.msra.mxu0 0.0
    %1778 = vmatprep.subr.mxu0 0.0
    %1779 = vmatpush1.msra.mxu0 0.0
    %1780 = vmatprep.subr.mxu0 0.0
    %1781 = vmatpush1.msra.mxu0 0.0
    %1782 = vmatprep.subr.mxu0 0.0
    %1783 = vmatpush1.msra.mxu0 0.0
    %1784 = vmatprep.subr.mxu0 0.0
    %1785 = vmatpush1.msra.mxu0 0.0
    %1786 = vmatprep.subr.mxu0 0.0
    %1787 = vmatpush1.msra.mxu0 0.0
    %1788 = vmatprep.subr.mxu0 0.0
    %1789 = vmatpush1.msra.mxu0 0.0
    %1790 = vmatprep.subr.mxu0 0.0
    %1791 = vmatpush1.msra.mxu0 0.0
    %1792 = vmatprep.subr.mxu0 0.0
    %1793 = vmatpush1.msra.mxu0 0.0
    %1794 = vmatprep.subr.mxu0 0.0
    %1795 = vmatpush1.msra.mxu0 0.0
    %1796 = vmatprep.subr.mxu0 0.0
    %1797 = vmatpush1.msra.mxu0 0.0
    %1798 = vmatprep.mubr.f32.mxu0 0.0
    %1799 = vmatmul.mubr.f32.gmra.mrb[0].mxu0 %v1732
    %v1800 = vpop.f32.mrb[0].mxu0
    %v1801 = vadd.f32 %v1727, %v1800
    %v1802 = vpop.f32.mrb[0].mxu0
    %1803 = vdwg.mxu0
    %v1804 = vadd.f32 %v1801, %v449
    %v1805 = vtanh.pop %v1804
    %1806 = vst.msk [vmem:[#allocation2 + $0x6] sm:$0x1] %vm452, %v1805
    %1807 = vst.msk [vmem:[#allocation2 + $0xd] sm:$0x2] %vm454, %v1805
    %1808 = vmatprep.subr.mxu0 0.0
    %1809 = vmatpush1.msra.mxu0 %v28
    %1810 = vmatprep.subr.mxu0 0.0
    %1811 = vmatpush1.msra.mxu0 0.0
    %1812 = vmatprep.subr.mxu0 0.0
    %1813 = vmatpush1.msra.mxu0 0.0
    %1814 = vmatprep.subr.mxu0 0.0
    %1815 = vmatpush1.msra.mxu0 0.0
    %1816 = vmatprep.subr.mxu0 0.0
    %1817 = vmatpush1.msra.mxu0 0.0
    %1818 = vmatprep.subr.mxu0 0.0
    %1819 = vmatpush1.msra.mxu0 0.0
    %1820 = vmatprep.subr.mxu0 0.0
    %1821 = vmatpush1.msra.mxu0 0.0
    %1822 = vmatprep.subr.mxu0 0.0
    %1823 = vmatpush1.msra.mxu0 0.0
    %1824 = vmatprep.subr.mxu0 0.0
    %1825 = vmatpush1.msra.mxu0 0.0
    %1826 = vmatprep.subr.mxu0 0.0
    %1827 = vmatpush1.msra.mxu0 0.0
    %1828 = vmatprep.subr.mxu0 0.0
    %1829 = vmatpush1.msra.mxu0 0.0
    %1830 = vmatprep.subr.mxu0 0.0
    %1831 = vmatpush1.msra.mxu0 0.0
    %1832 = vmatprep.subr.mxu0 0.0
    %1833 = vmatpush1.msra.mxu0 0.0
    %1834 = vmatprep.subr.mxu0 0.0
    %1835 = vmatpush1.msra.mxu0 0.0
    %1836 = vmatprep.subr.mxu0 0.0
    %1837 = vmatpush1.msra.mxu0 0.0
    %1838 = vmatprep.subr.mxu0 0.0
    %1839 = vmatpush1.msra.mxu0 0.0
    %1840 = vmatprep.subr.mxu0 0.0
    %1841 = vmatpush1.msra.mxu0 0.0
    %1842 = vmatprep.subr.mxu0 0.0
    %1843 = vmatpush1.msra.mxu0 0.0
    %1844 = vmatprep.subr.mxu0 0.0
    %1845 = vmatpush1.msra.mxu0 0.0
    %1846 = vmatprep.subr.mxu0 0.0
    %1847 = vmatpush1.msra.mxu0 0.0
    %1848 = vmatprep.subr.mxu0 0.0
    %1849 = vmatpush1.msra.mxu0 0.0
    %1850 = vmatprep.subr.mxu0 0.0
    %1851 = vmatpush1.msra.mxu0 0.0
    %1852 = vmatprep.subr.mxu0 0.0
    %1853 = vmatpush1.msra.mxu0 0.0
    %1854 = vmatprep.subr.mxu0 0.0
    %1855 = vmatpush1.msra.mxu0 0.0
    %1856 = vmatprep.subr.mxu0 0.0
    %1857 = vmatpush1.msra.mxu0 0.0
    %1858 = vmatprep.subr.mxu0 0.0
    %1859 = vmatpush1.msra.mxu0 0.0
    %1860 = vmatprep.subr.mxu0 0.0
    %1861 = vmatpush1.msra.mxu0 0.0
    %1862 = vmatprep.subr.mxu0 0.0
    %1863 = vmatpush1.msra.mxu0 0.0
    %1864 = vmatprep.subr.mxu0 0.0
    %1865 = vmatpush1.msra.mxu0 0.0
    %1866 = vmatprep.subr.mxu0 0.0
    %1867 = vmatpush1.msra.mxu0 0.0
    %1868 = vmatprep.subr.mxu0 0.0
    %1869 = vmatpush1.msra.mxu0 0.0
    %1870 = vmatprep.subr.mxu0 0.0
    %1871 = vmatpush1.msra.mxu0 0.0
    %1872 = vmatprep.mubr.f32.mxu0 0.0
    %1873 = vmatmul.mubr.f32.gmra.mrb[0].mxu0 %v1732
    %v1874 = vpop.f32.mrb[0].mxu0
    %v1875 = vadd.f32 0.0, %v1874
    %v1876 = vpop.f32.mrb[0].mxu0
    %1877 = vdwg.mxu0
    %v1879 = vrot.slane %v1875, 2
    %v1881 = vadd.f32 %v224, %v1879
    %v1882 = vtanh.pop %v1881
    %v1884 = vsel %vm227, %v1805, 0
    %1886 = vmatprep.subr.mxu0 0.0
    %1887 = vmatpush1.msra.mxu0 %v30
    %1888 = vmatprep.subr.mxu0 0.0
    %1889 = vmatpush1.msra.mxu0 0.0
    %1890 = vmatprep.subr.mxu0 0.0
    %1891 = vmatpush1.msra.mxu0 0.0
    %1892 = vmatprep.subr.mxu0 0.0
    %1893 = vmatpush1.msra.mxu0 0.0
    %1894 = vmatprep.subr.mxu0 0.0
    %1895 = vmatpush1.msra.mxu0 0.0
    %1896 = vmatprep.subr.mxu0 0.0
    %1897 = vmatpush1.msra.mxu0 0.0
    %1898 = vmatprep.subr.mxu0 0.0
    %1899 = vmatpush1.msra.mxu0 0.0
    %1900 = vmatprep.subr.mxu0 0.0
    %1901 = vmatpush1.msra.mxu0 0.0
    %1902 = vmatprep.subr.mxu0 0.0
    %1903 = vmatpush1.msra.mxu0 0.0
    %1904 = vmatprep.subr.mxu0 0.0
    %1905 = vmatpush1.msra.mxu0 0.0
    %1906 = vmatprep.subr.mxu0 0.0
    %1907 = vmatpush1.msra.mxu0 0.0
    %1908 = vmatprep.subr.mxu0 0.0
    %1909 = vmatpush1.msra.mxu0 0.0
    %1910 = vmatprep.subr.mxu0 0.0
    %1911 = vmatpush1.msra.mxu0 0.0
    %1912 = vmatprep.subr.mxu0 0.0
    %1913 = vmatpush1.msra.mxu0 0.0
    %1914 = vmatprep.subr.mxu0 0.0
    %1915 = vmatpush1.msra.mxu0 0.0
    %1916 = vmatprep.subr.mxu0 0.0
    %1917 = vmatpush1.msra.mxu0 0.0
    %1918 = vmatprep.subr.mxu0 0.0
    %1919 = vmatpush1.msra.mxu0 0.0
    %1920 = vmatprep.subr.mxu0 0.0
    %1921 = vmatpush1.msra.mxu0 0.0
    %1922 = vmatprep.subr.mxu0 0.0
    %1923 = vmatpush1.msra.mxu0 0.0
    %1924 = vmatprep.subr.mxu0 0.0
    %1925 = vmatpush1.msra.mxu0 0.0
    %1926 = vmatprep.subr.mxu0 0.0
    %1927 = vmatpush1.msra.mxu0 0.0
    %1928 = vmatprep.subr.mxu0 0.0
    %1929 = vmatpush1.msra.mxu0 0.0
    %1930 = vmatprep.subr.mxu0 0.0
    %1931 = vmatpush1.msra.mxu0 0.0
    %1932 = vmatprep.subr.mxu0 0.0
    %1933 = vmatpush1.msra.mxu0 0.0
    %1934 = vmatprep.subr.mxu0 0.0
    %1935 = vmatpush1.msra.mxu0 0.0
    %1936 = vmatprep.subr.mxu0 0.0
    %1937 = vmatpush1.msra.mxu0 0.0
    %1938 = vmatprep.subr.mxu0 0.0
    %1939 = vmatpush1.msra.mxu0 0.0
    %1940 = vmatprep.subr.mxu0 0.0
    %1941 = vmatpush1.msra.mxu0 0.0
    %1942 = vmatprep.subr.mxu0 0.0
    %1943 = vmatpush1.msra.mxu0 0.0
    %1944 = vmatprep.subr.mxu0 0.0
    %1945 = vmatpush1.msra.mxu0 0.0
    %1946 = vmatprep.subr.mxu0 0.0
    %1947 = vmatpush1.msra.mxu0 0.0
    %1948 = vmatprep.subr.mxu0 0.0
    %1949 = vmatpush1.msra.mxu0 0.0
    %1950 = vmatprep.mubr.f32.mxu0 0.0
    %1951 = vmatmul.mubr.f32.gmra.mrb[0].mxu0 %v1884
    %v1952 = vpop.f32.mrb[0].mxu0
    %v1953 = vadd.f32 0.0, %v1952
    %v1954 = vpop.f32.mrb[0].mxu0
    %1955 = vdwg.mxu0
    %v1957 = vrot.slane %v1882, 6
    %v1958 = vsel %vm227, %v1957, 0
    %1960 = vmatprep.subr.mxu0 0.0
    %1961 = vmatpush1.msra.mxu0 %v29
    %1962 = vmatprep.subr.mxu0 0.0
    %1963 = vmatpush1.msra.mxu0 0.0
    %1964 = vmatprep.subr.mxu0 0.0
    %1965 = vmatpush1.msra.mxu0 0.0
    %1966 = vmatprep.subr.mxu0 0.0
    %1967 = vmatpush1.msra.mxu0 0.0
    %1968 = vmatprep.subr.mxu0 0.0
    %1969 = vmatpush1.msra.mxu0 0.0
    %1970 = vmatprep.subr.mxu0 0.0
    %1971 = vmatpush1.msra.mxu0 0.0
    %1972 = vmatprep.subr.mxu0 0.0
    %1973 = vmatpush1.msra.mxu0 0.0
    %1974 = vmatprep.subr.mxu0 0.0
    %1975 = vmatpush1.msra.mxu0 0.0
    %1976 = vmatprep.subr.mxu0 0.0
    %1977 = vmatpush1.msra.mxu0 0.0
    %1978 = vmatprep.subr.mxu0 0.0
    %1979 = vmatpush1.msra.mxu0 0.0
    %1980 = vmatprep.subr.mxu0 0.0
    %1981 = vmatpush1.msra.mxu0 0.0
    %1982 = vmatprep.subr.mxu0 0.0
    %1983 = vmatpush1.msra.mxu0 0.0
    %1984 = vmatprep.subr.mxu0 0.0
    %1985 = vmatpush1.msra.mxu0 0.0
    %1986 = vmatprep.subr.mxu0 0.0
    %1987 = vmatpush1.msra.mxu0 0.0
    %1988 = vmatprep.subr.mxu0 0.0
    %1989 = vmatpush1.msra.mxu0 0.0
    %1990 = vmatprep.subr.mxu0 0.0
    %1991 = vmatpush1.msra.mxu0 0.0
    %1992 = vmatprep.subr.mxu0 0.0
    %1993 = vmatpush1.msra.mxu0 0.0
    %1994 = vmatprep.subr.mxu0 0.0
    %1995 = vmatpush1.msra.mxu0 0.0
    %1996 = vmatprep.subr.mxu0 0.0
    %1997 = vmatpush1.msra.mxu0 0.0
    %1998 = vmatprep.subr.mxu0 0.0
    %1999 = vmatpush1.msra.mxu0 0.0
    %2000 = vmatprep.subr.mxu0 0.0
    %2001 = vmatpush1.msra.mxu0 0.0
    %2002 = vmatprep.subr.mxu0 0.0
    %2003 = vmatpush1.msra.mxu0 0.0
    %2004 = vmatprep.subr.mxu0 0.0
    %2005 = vmatpush1.msra.mxu0 0.0
    %2006 = vmatprep.subr.mxu0 0.0
    %2007 = vmatpush1.msra.mxu0 0.0
    %2008 = vmatprep.subr.mxu0 0.0
    %2009 = vmatpush1.msra.mxu0 0.0
    %2010 = vmatprep.subr.mxu0 0.0
    %2011 = vmatpush1.msra.mxu0 0.0
    %2012 = vmatprep.subr.mxu0 0.0
    %2013 = vmatpush1.msra.mxu0 0.0
    %2014 = vmatprep.subr.mxu0 0.0
    %2015 = vmatpush1.msra.mxu0 0.0
    %2016 = vmatprep.subr.mxu0 0.0
    %2017 = vmatpush1.msra.mxu0 0.0
    %2018 = vmatprep.subr.mxu0 0.0
    %2019 = vmatpush1.msra.mxu0 0.0
    %2020 = vmatprep.subr.mxu0 0.0
    %2021 = vmatpush1.msra.mxu0 0.0
    %2022 = vmatprep.subr.mxu0 0.0
    %2023 = vmatpush1.msra.mxu0 0.0
    %2024 = vmatprep.mubr.f32.mxu0 0.0
    %2025 = vmatmul.mubr.f32.gmra.mrb[0].mxu0 %v1958
    %v2026 = vpop.f32.mrb[0].mxu0
    %v2027 = vadd.f32 %v1953, %v2026
    %v2028 = vpop.f32.mrb[0].mxu0
    %2029 = vdwg.mxu0
    %v2030 = vadd.f32 %v2027, %v449
    %v2031 = vtanh.pop %v2030
    %2032 = vst.msk [vmem:[#allocation2 + $0x7] sm:$0x1] %vm452, %v2031
    %2033 = vst.msk [vmem:[#allocation2 + $0xe] sm:$0x2] %vm454, %v2031
    %v2034 = vld [vmem:[#allocation2] sm:$0xff]
    %v2035 = vld [vmem:[#allocation2 + $0x8] sm:$0xff]
    %v2036 = vlaneseq
    %v2037 = vshrl.u32 %v2036, 7
    %v2038 = vsub.s32 0, %v2037
    %v2039 = vrot.slane %v34, %v2038
    %v2041 = vsel %vm227, %v2034, 0
    %v2044 = vsel %vm227, %v2035, 0
    %2046 = vmatprep.subr.mxu0 0.0
    %2047 = vmatpush1.msra.mxu0 %v31
    %2048 = vmatprep.subr.mxu0 0.0
    %2049 = vmatpush1.msra.mxu0 0.0
    %2050 = vmatprep.subr.mxu0 0.0
    %2051 = vmatpush1.msra.mxu0 0.0
    %2052 = vmatprep.subr.mxu0 0.0
    %2053 = vmatpush1.msra.mxu0 0.0
    %2054 = vmatprep.subr.mxu0 0.0
    %2055 = vmatpush1.msra.mxu0 0.0
    %2056 = vmatprep.subr.mxu0 0.0
    %2057 = vmatpush1.msra.mxu0 0.0
    %2058 = vmatprep.subr.mxu0 0.0
    %2059 = vmatpush1.msra.mxu0 0.0
    %2060 = vmatprep.subr.mxu0 0.0
    %2061 = vmatpush1.msra.mxu0 0.0
    %2062 = vmatprep.subr.mxu0 0.0
    %2063 = vmatpush1.msra.mxu0 0.0
    %2064 = vmatprep.subr.mxu0 0.0
    %2065 = vmatpush1.msra.mxu0 0.0
    %2066 = vmatprep.subr.mxu0 0.0
    %2067 = vmatpush1.msra.mxu0 0.0
    %2068 = vmatprep.subr.mxu0 0.0
    %2069 = vmatpush1.msra.mxu0 0.0
    %2070 = vmatprep.subr.mxu0 0.0
    %2071 = vmatpush1.msra.mxu0 0.0
    %2072 = vmatprep.subr.mxu0 0.0
    %2073 = vmatpush1.msra.mxu0 0.0
    %2074 = vmatprep.subr.mxu0 0.0
    %2075 = vmatpush1.msra.mxu0 0.0
    %2076 = vmatprep.subr.mxu0 0.0
    %2077 = vmatpush1.msra.mxu0 0.0
    %2078 = vmatprep.subr.mxu0 0.0
    %2079 = vmatpush1.msra.mxu0 0.0
    %2080 = vmatprep.subr.mxu0 0.0
    %2081 = vmatpush1.msra.mxu0 0.0
    %2082 = vmatprep.subr.mxu0 0.0
    %2083 = vmatpush1.msra.mxu0 0.0
    %2084 = vmatprep.subr.mxu0 0.0
    %2085 = vmatpush1.msra.mxu0 0.0
    %2086 = vmatprep.subr.mxu0 0.0
    %2087 = vmatpush1.msra.mxu0 0.0
    %2088 = vmatprep.subr.mxu0 0.0
    %2089 = vmatpush1.msra.mxu0 0.0
    %2090 = vmatprep.subr.mxu0 0.0
    %2091 = vmatpush1.msra.mxu0 0.0
    %2092 = vmatprep.subr.mxu0 0.0
    %2093 = vmatpush1.msra.mxu0 0.0
    %2094 = vmatprep.subr.mxu0 0.0
    %2095 = vmatpush1.msra.mxu0 0.0
    %2096 = vmatprep.subr.mxu0 0.0
    %2097 = vmatpush1.msra.mxu0 0.0
    %2098 = vmatprep.subr.mxu0 0.0
    %2099 = vmatpush1.msra.mxu0 0.0
    %2100 = vmatprep.subr.mxu0 0.0
    %2101 = vmatpush1.msra.mxu0 0.0
    %2102 = vmatprep.subr.mxu0 0.0
    %2103 = vmatpush1.msra.mxu0 0.0
    %2104 = vmatprep.subr.mxu0 0.0
    %2105 = vmatpush1.msra.mxu0 0.0
    %2106 = vmatprep.subr.mxu0 0.0
    %2107 = vmatpush1.msra.mxu0 0.0
    %2108 = vmatprep.subr.mxu0 0.0
    %2109 = vmatpush1.msra.mxu0 0.0
    %2110 = vmatprep.mubr.f32.mxu0 0.0
    %2111 = vmatmul.mubr.f32.gmra.mrb[0].mxu0 %v2041
    %v2112 = vpop.f32.mrb[0].mxu0
    %v2113 = vadd.f32 %v2039, %v2112
    %v2114 = vpop.f32.mrb[0].mxu0
    %2115 = vmatprep.mubr.f32.mxu0 0.0
    %2116 = vmatmul.mubr.f32.gmra.mrb[0].mxu0 %v2044
    %v2117 = vpop.f32.mrb[0].mxu0
    %v2118 = vadd.f32 %v2039, %v2117
    %v2119 = vpop.f32.mrb[0].mxu0
    %2120 = vdwg.mxu0
    %2121 = vst.msk [vmem:[%s2] sm:$0xff] %vm51, %v2113
    %2122 = vst.msk [vmem:[%s2 + $0x8] sm:$0xff] %vm51, %v2118
    // Predicated region
    $region14: #{model_forward.1} parent=1 // pred_check
      _
    $region15: #{model_forward.1} parent=1 // pred_check_branch
      %2124 = sbr.rel (0) target = $region17
    $region16: #{model_forward.1} parent=1 // pred_region
      _
    $region17: #{model_forward.1} parent=1 // pred_fallthru
      _
    // Predicated region
    $region18: #{model_forward.1} parent=1 // pred_check
      _
    $region19: #{model_forward.1} parent=1 // pred_check_branch
      %2126 = sbr.rel (0) target = $region21
    $region20: #{model_forward.1} parent=1 // pred_region
      _
    $region21: #{model_forward.1} parent=1 // pred_fallthru
      _
    %2127 = vsyncpa [#allocation4], 1

</llo_original>
